<compile_context>
chip_gen: v6e
topology: v6e:2x2x1
jax: 0.10.0
libtpu: 0.0.40
codegen_flags: <defaults>
</compile_context>

<pallas_src>
import functools

import jax
import jax.numpy as jnp
from jax.experimental import pallas as pl
from jax.experimental.pallas import tpu as pltpu

_VOCAB = 4
_VOCAB_PAD = 8   # pad vocab rows to one full sublane group for the one-hot matmul
_BATCH_PAD = 8   # pad batch rows to one full sublane group (aligned per-step slices)


def _xor_lstm_kernel(idx_ref, embw0_ref, wih_ref, whh_ref, b_ref, wp_ref,
                     out_ref, *, depth, seq_len, batch_pad, hidden):
    """Fused embedding + pair-sum + wavefront multi-layer LSTM + Linear(H,1).

    idx_ref  : (2, T*B_pad, 1) int32  time-major token ids (row n = t*B_pad + b)
    embw0_ref: (VOCAB_PAD, 4H) f32    emb_pad @ Wih_scaled[0]  (layer-0 fold)
    wih_ref  : (depth, H, 4H)  f32    input->gates weights, i/f/o cols pre-scaled
    whh_ref  : (depth, H, 4H)  f32    hidden->gates weights, i/f/o cols pre-scaled
    b_ref    : (depth, 1, 4H)  f32    combined bias (b_ih + b_hh), pre-scaled
    wp_ref   : (1, H)          f32    projection weight (row vector)
    out_ref  : (B_pad, 1)      f32
    """
    B, T, H = batch_pad, seq_len, hidden
    N = T * B

    # Hoist weight loads out of the fully unrolled recurrence.
    whh = [whh_ref[l] for l in range(depth)]
    wih = [wih_ref[l] if l > 0 else None for l in range(depth)]  # layer 0 folded
    bias = [b_ref[l] for l in range(depth)]

    # --- embedding gather + pair-sum + layer-0 input projection ------------
    # One (N, 8) one-hot-count matmul against the pre-folded (8, 4H) table.
    idx = idx_ref[...]                                       # (2, N, 1) int32
    vocab = embw0_ref.shape[0]
    iota = jax.lax.broadcasted_iota(jnp.int32, (N, vocab), 1)
    counts = ((idx[0] == iota).astype(jnp.float32)
              + (idx[1] == iota).astype(jnp.float32))        # (N, vocab)
    gates_x0 = jnp.dot(counts, embw0_ref[...],
                       preferred_element_type=jnp.float32) + bias[0]   # (N, 4H)

    h = [jnp.zeros((B, H), jnp.float32) for _ in range(depth)]
    c = [jnp.zeros((B, H), jnp.float32) for _ in range(depth)]

    def cell(gates, c_prev):
        # Single EUP push for all 4 gate blocks; i/f/o columns were pre-scaled
        # by 0.5 on the host so sigmoid(x) == 0.5*tanh(x/2) + 0.5.
        th = jnp.tanh(gates)                 # (B, 4H)
        sg = th * 0.5 + 0.5                  # one full-vreg VPU fma
        i_g = sg[:, 0 * H:1 * H]
        f_g = sg[:, 1 * H:2 * H]
        o_g = sg[:, 3 * H:4 * H]
        g_g = th[:, 2 * H:3 * H]
        c_new = f_g * c_prev + i_g * g_g
        h_new = o_g * jnp.tanh(c_new)
        return h_new, c_new

    # --- wavefront schedule -------------------------------------------------
    # Iteration s runs (layer l, timestep t = s - l).  Every active cell only
    # reads state produced at iteration s-1 (h_prev snapshot), so the depth
    # updates per iteration are independent and overlap in the MXU/EUP FIFOs.
    for s in range(T + depth - 1):
        h_prev = list(h)                     # snapshot of iteration s-1 outputs
        for l in range(depth):
            t = s - l
            if t < 0 or t >= T:
                continue
            if l == 0:
                # Sublane-aligned static slice (B == 8) of the hoisted
                # input-projection; only h @ Whh stays on the serial path.
                gates = gates_x0[t * B:(t + 1) * B, :] + jnp.dot(
                    h_prev[0], whh[0], preferred_element_type=jnp.float32)
            else:
                # Input projection fused into the recurrence: no layer_in /
                # gates_x materialization, no concatenate between layers.
                gates = (jnp.dot(h_prev[l - 1], wih[l],
                                 preferred_element_type=jnp.float32)
                         + jnp.dot(h_prev[l], whh[l],
                                   preferred_element_type=jnp.float32)
                         + bias[l])
            h[l], c[l] = cell(gates, c[l])

    # --- Linear(H, 1, bias=False): VPU multiply + lane reduction -----------
    out_ref[...] = jnp.sum(h[depth - 1] * wp_ref[...], axis=-1, keepdims=True)


def model_forward(inp, emb, wih, whh, b, wp):
    """inp: (2, B, T, 1) int tokens in [0, 4). Returns (B, 1) f32."""
    idx = jnp.squeeze(inp, axis=-1).astype(jnp.int32)        # (2, B, T)
    _, B, T = idx.shape
    H = emb.shape[1]
    depth = wih.shape[0]
    B_pad = _BATCH_PAD

    # Batch pad to one full sublane group; padded rows use token 0 and their
    # results are discarded after the call.
    idx_p = jnp.zeros((2, B_pad, T), jnp.int32).at[:, :B].set(idx)
    # Time-major flatten so each timestep is a contiguous, 8-aligned row block.
    idx_tm = jnp.transpose(idx_p, (0, 2, 1)).reshape(2, T * B_pad, 1)

    # Pre-scale i/f/o gate columns by 0.5 (sigmoid-via-tanh in the kernel).
    gate_scale = jnp.concatenate(
        [jnp.full((1, 1, H), 0.5, jnp.float32),
         jnp.full((1, 1, H), 0.5, jnp.float32),
         jnp.ones((1, 1, H), jnp.float32),
         jnp.full((1, 1, H), 0.5, jnp.float32)], axis=-1)    # (1, 1, 4H)
    wih_s = wih * gate_scale
    whh_s = whh * gate_scale
    b_s = b * gate_scale

    # Fold the embedding table into layer 0's (pre-scaled) input projection.
    emb_pad = jnp.zeros((_VOCAB_PAD, H), jnp.float32).at[:_VOCAB].set(emb)
    emb_wih0 = emb_pad @ wih_s[0]                            # (VOCAB_PAD, 4H)

    wp_row = wp.reshape(1, H)

    kernel = functools.partial(_xor_lstm_kernel, depth=depth, seq_len=T,
                               batch_pad=B_pad, hidden=H)

    n_rows = T * B_pad
    flops = 2 * n_rows * _VOCAB_PAD * 4 * H                       # one-hot matmul
    flops += T * (2 * B_pad * H * 4 * H + 12 * B_pad * H)         # layer 0 steps
    flops += (depth - 1) * T * (4 * B_pad * H * 4 * H + 12 * B_pad * H)
    transcendentals = depth * T * B_pad * 5 * H                   # tanh(4H)+tanh(H)
    operands = (idx_tm, emb_wih0, wih_s, whh_s, b_s, wp_row)
    bytes_in = sum(int(a.size) * a.dtype.itemsize for a in operands)
    cost = pl.CostEstimate(flops=flops, transcendentals=transcendentals,
                           bytes_accessed=bytes_in + B_pad * 4)

    vmem = pltpu.MemorySpace.VMEM
    out = pl.pallas_call(
        kernel,
        out_shape=jax.ShapeDtypeStruct((B_pad, 1), jnp.float32),
        in_specs=[pl.BlockSpec(memory_space=vmem)] * 6,
        out_specs=pl.BlockSpec(memory_space=vmem),
        cost_estimate=cost,
    )(*operands)
    return out[:B]


def reference_forward(inp, emb, wih, whh, b, wp):
    """Pure-JAX reference of the same math (for correctness check)."""
    idx = jnp.squeeze(inp, axis=-1).astype(jnp.int32)
    x = emb[idx[0]] + emb[idx[1]]
    B, T, H = x.shape
    depth = wih.shape[0]
    seq = x
    for layer in range(depth):
        h = jnp.zeros((B, H), jnp.float32)
        c = jnp.zeros((B, H), jnp.float32)
        outs = []
        for t in range(T):
            gates = seq[:, t] @ wih[layer] + h @ whh[layer] + b[layer]
            i_g = jax.nn.sigmoid(gates[:, 0 * H:1 * H])
            f_g = jax.nn.sigmoid(gates[:, 1 * H:2 * H])
            g_g = jnp.tanh(gates[:, 2 * H:3 * H])
            o_g = jax.nn.sigmoid(gates[:, 3 * H:4 * H])
            c = f_g * c + i_g * g_g
            h = o_g * jnp.tanh(c)
            outs.append(h)
        seq = jnp.stack(outs, axis=1)
    return seq[:, -1] @ wp


def make_params(key, size, depth):
    """Deterministic init (PyTorch-style uniform(-1/sqrt(H), 1/sqrt(H)))."""
    ks = jax.random.split(key, 6)
    bound = 1.0 / jnp.sqrt(jnp.float32(size))
    emb = jax.random.normal(ks[0], (4, size), jnp.float32)
    # weight_ih_l{k}: (4H, H) in torch; stored transposed (depth, H, 4H).
    wih = jax.random.uniform(ks[1], (depth, size, 4 * size), jnp.float32,
                             -bound, bound)
    whh = jax.random.uniform(ks[2], (depth, size, 4 * size), jnp.float32,
                             -bound, bound)
    b_ih = jax.random.uniform(ks[3], (depth, 1, 4 * size), jnp.float32,
                              -bound, bound)
    b_hh = jax.random.uniform(ks[4], (depth, 1, 4 * size), jnp.float32,
                              -bound, bound)
    b = b_ih + b_hh
    # nn.Linear(size, 1, bias=False): torch weight (1, size); stored (size, 1).
    wp = jax.random.uniform(ks[5], (size, 1), jnp.float32, -bound, bound)
    return emb, wih, whh, b, wp


if __name__ == "__main__":
    size, depth = 32, 2
    batch, seq = 2, 8

    key = jax.random.PRNGKey(0)
    k_inp, k_par = jax.random.split(key)
    # Input matching `forward`: (2, B, T, 1) integer tokens in [0, 4).
    inp = jax.random.randint(k_inp, (2, batch, seq, 1), 0, 4, jnp.int32)
    emb, wih, whh, b, wp = make_params(k_par, size, depth)

    out = model_forward(inp, emb, wih, whh, b, wp)
    out = jax.block_until_ready(out)

    ref = jax.block_until_ready(reference_forward(inp, emb, wih, whh, b, wp))
    assert out.shape == (batch, 1), out.shape
    assert jnp.allclose(out, ref, atol=1e-4, rtol=1e-4), (out, ref)

    print("KERNEL_OK")
</pallas_src>

<mosaic_0001>
module attributes {stable_mosaic.version = 11 : i64} {
  func.func @_xor_lstm_kernel(%arg0: memref<2x64x1xi32, #tpu.memory_space<vmem>>, %arg1: memref<8x128xf32, #tpu.memory_space<vmem>>, %arg2: memref<2x32x128xf32, #tpu.memory_space<vmem>>, %arg3: memref<2x32x128xf32, #tpu.memory_space<vmem>>, %arg4: memref<2x1x128xf32, #tpu.memory_space<vmem>>, %arg5: memref<1x32xf32, #tpu.memory_space<vmem>>, %arg6: memref<8x1xf32, #tpu.memory_space<vmem>>) attributes {dimension_semantics = [], scalar_prefetch = 0 : i64, scratch_operands = 0 : i64, tpu.core_type = #tpu.core_type<tc>} {
    %c0 = arith.constant 0 : index
    %c0_0 = arith.constant 0 : index
    %c0_1 = arith.constant 0 : index
    %0 = vector.load %arg3[%c0, %c0_0, %c0_1] : memref<2x32x128xf32, #tpu.memory_space<vmem>>, vector<1x32x128xf32>
    %1 = vector.shape_cast %0 : vector<1x32x128xf32> to vector<32x128xf32>
    %c1 = arith.constant 1 : index
    %c0_2 = arith.constant 0 : index
    %c0_3 = arith.constant 0 : index
    %2 = vector.load %arg3[%c1, %c0_2, %c0_3] : memref<2x32x128xf32, #tpu.memory_space<vmem>>, vector<1x32x128xf32>
    %3 = vector.shape_cast %2 : vector<1x32x128xf32> to vector<32x128xf32>
    %c1_4 = arith.constant 1 : index
    %c0_5 = arith.constant 0 : index
    %c0_6 = arith.constant 0 : index
    %4 = vector.load %arg2[%c1_4, %c0_5, %c0_6] : memref<2x32x128xf32, #tpu.memory_space<vmem>>, vector<1x32x128xf32>
    %5 = vector.shape_cast %4 : vector<1x32x128xf32> to vector<32x128xf32>
    %c0_7 = arith.constant 0 : index
    %c0_8 = arith.constant 0 : index
    %c0_9 = arith.constant 0 : index
    %6 = vector.load %arg4[%c0_7, %c0_8, %c0_9] : memref<2x1x128xf32, #tpu.memory_space<vmem>>, vector<1x1x128xf32>
    %7 = vector.shape_cast %6 : vector<1x1x128xf32> to vector<1x128xf32>
    %c1_10 = arith.constant 1 : index
    %c0_11 = arith.constant 0 : index
    %c0_12 = arith.constant 0 : index
    %8 = vector.load %arg4[%c1_10, %c0_11, %c0_12] : memref<2x1x128xf32, #tpu.memory_space<vmem>>, vector<1x1x128xf32>
    %9 = vector.shape_cast %8 : vector<1x1x128xf32> to vector<1x128xf32>
    %c0_13 = arith.constant 0 : index
    %c0_14 = arith.constant 0 : index
    %c0_15 = arith.constant 0 : index
    %10 = vector.load %arg0[%c0_13, %c0_14, %c0_15] : memref<2x64x1xi32, #tpu.memory_space<vmem>>, vector<2x64x1xi32>
    %11 = tpu.iota {dimensions = array<i32: 1>} : vector<64x8xi32>
    %12 = vector.extract_strided_slice %10 {offsets = [0, 0, 0], sizes = [1, 64, 1], strides = [1, 1, 1]} : vector<2x64x1xi32> to vector<1x64x1xi32>
    %13 = vector.shape_cast %12 : vector<1x64x1xi32> to vector<64x1xi32>
    %14 = vector.broadcast %13 : vector<64x1xi32> to vector<64x8xi32>
    %15 = arith.cmpi eq, %14, %11 : vector<64x8xi32>
    %16 = arith.extui %15 : vector<64x8xi1> to vector<64x8xi32>
    %17 = arith.sitofp %16 : vector<64x8xi32> to vector<64x8xf32>
    %18 = vector.extract_strided_slice %10 {offsets = [1, 0, 0], sizes = [1, 64, 1], strides = [1, 1, 1]} : vector<2x64x1xi32> to vector<1x64x1xi32>
    %19 = vector.shape_cast %18 : vector<1x64x1xi32> to vector<64x1xi32>
    %20 = vector.broadcast %19 : vector<64x1xi32> to vector<64x8xi32>
    %21 = arith.cmpi eq, %20, %11 : vector<64x8xi32>
    %22 = arith.extui %21 : vector<64x8xi1> to vector<64x8xi32>
    %23 = arith.sitofp %22 : vector<64x8xi32> to vector<64x8xf32>
    %24 = arith.addf %17, %23 : vector<64x8xf32>
    %c0_16 = arith.constant 0 : index
    %c0_17 = arith.constant 0 : index
    %25 = vector.load %arg1[%c0_16, %c0_17] : memref<8x128xf32, #tpu.memory_space<vmem>>, vector<8x128xf32>
    %cst = arith.constant dense<0.000000e+00> : vector<64x128xf32>
    %26 = tpu.matmul %24, %25, %cst {dimension_numbers = #tpu.dot_dimension_numbers<[1], [0], [0], [1], [0, 0, 1, 1], [], []>} : vector<64x8xf32>, vector<8x128xf32>, vector<64x128xf32> -> vector<64x128xf32>
    %27 = vector.broadcast %7 : vector<1x128xf32> to vector<64x128xf32>
    %28 = arith.addf %26, %27 : vector<64x128xf32>
    %cst_18 = arith.constant 0.000000e+00 : f32
    %29 = vector.broadcast %cst_18 : f32 to vector<8x32xf32>
    %cst_19 = arith.constant 0.000000e+00 : f32
    %30 = vector.broadcast %cst_19 : f32 to vector<8x32xf32>
    %cst_20 = arith.constant 0.000000e+00 : f32
    %31 = vector.broadcast %cst_20 : f32 to vector<8x32xf32>
    %cst_21 = arith.constant 0.000000e+00 : f32
    %32 = vector.broadcast %cst_21 : f32 to vector<8x32xf32>
    %33 = vector.extract_strided_slice %28 {offsets = [0, 0], sizes = [8, 128], strides = [1, 1]} : vector<64x128xf32> to vector<8x128xf32>
    %cst_22 = arith.constant dense<0.000000e+00> : vector<8x128xf32>
    %34 = tpu.matmul %29, %1, %cst_22 {dimension_numbers = #tpu.dot_dimension_numbers<[1], [0], [0], [1], [0, 0, 1, 1], [], []>} : vector<8x32xf32>, vector<32x128xf32>, vector<8x128xf32> -> vector<8x128xf32>
    %35 = arith.addf %33, %34 : vector<8x128xf32>
    %36 = math.tanh %35 : vector<8x128xf32>
    %cst_23 = arith.constant 5.000000e-01 : f32
    %37 = vector.broadcast %cst_23 : f32 to vector<8x128xf32>
    %38 = arith.mulf %36, %37 : vector<8x128xf32>
    %cst_24 = arith.constant 5.000000e-01 : f32
    %39 = vector.broadcast %cst_24 : f32 to vector<8x128xf32>
    %40 = arith.addf %38, %39 : vector<8x128xf32>
    %41 = vector.extract_strided_slice %40 {offsets = [0, 0], sizes = [8, 32], strides = [1, 1]} : vector<8x128xf32> to vector<8x32xf32>
    %42 = vector.extract_strided_slice %40 {offsets = [0, 32], sizes = [8, 32], strides = [1, 1]} : vector<8x128xf32> to vector<8x32xf32>
    %43 = vector.extract_strided_slice %40 {offsets = [0, 96], sizes = [8, 32], strides = [1, 1]} : vector<8x128xf32> to vector<8x32xf32>
    %44 = vector.extract_strided_slice %36 {offsets = [0, 64], sizes = [8, 32], strides = [1, 1]} : vector<8x128xf32> to vector<8x32xf32>
    %45 = arith.mulf %42, %31 : vector<8x32xf32>
    %46 = arith.mulf %41, %44 : vector<8x32xf32>
    %47 = arith.addf %45, %46 : vector<8x32xf32>
    %48 = math.tanh %47 : vector<8x32xf32>
    %49 = arith.mulf %43, %48 : vector<8x32xf32>
    %50 = vector.extract_strided_slice %28 {offsets = [8, 0], sizes = [8, 128], strides = [1, 1]} : vector<64x128xf32> to vector<8x128xf32>
    %cst_25 = arith.constant dense<0.000000e+00> : vector<8x128xf32>
    %51 = tpu.matmul %49, %1, %cst_25 {dimension_numbers = #tpu.dot_dimension_numbers<[1], [0], [0], [1], [0, 0, 1, 1], [], []>} : vector<8x32xf32>, vector<32x128xf32>, vector<8x128xf32> -> vector<8x128xf32>
    %52 = arith.addf %50, %51 : vector<8x128xf32>
    %53 = math.tanh %52 : vector<8x128xf32>
    %cst_26 = arith.constant 5.000000e-01 : f32
    %54 = vector.broadcast %cst_26 : f32 to vector<8x128xf32>
    %55 = arith.mulf %53, %54 : vector<8x128xf32>
    %cst_27 = arith.constant 5.000000e-01 : f32
    %56 = vector.broadcast %cst_27 : f32 to vector<8x128xf32>
    %57 = arith.addf %55, %56 : vector<8x128xf32>
    %58 = vector.extract_strided_slice %57 {offsets = [0, 0], sizes = [8, 32], strides = [1, 1]} : vector<8x128xf32> to vector<8x32xf32>
    %59 = vector.extract_strided_slice %57 {offsets = [0, 32], sizes = [8, 32], strides = [1, 1]} : vector<8x128xf32> to vector<8x32xf32>
    %60 = vector.extract_strided_slice %57 {offsets = [0, 96], sizes = [8, 32], strides = [1, 1]} : vector<8x128xf32> to vector<8x32xf32>
    %61 = vector.extract_strided_slice %53 {offsets = [0, 64], sizes = [8, 32], strides = [1, 1]} : vector<8x128xf32> to vector<8x32xf32>
    %62 = arith.mulf %59, %47 : vector<8x32xf32>
    %63 = arith.mulf %58, %61 : vector<8x32xf32>
    %64 = arith.addf %62, %63 : vector<8x32xf32>
    %65 = math.tanh %64 : vector<8x32xf32>
    %66 = arith.mulf %60, %65 : vector<8x32xf32>
    %cst_28 = arith.constant dense<0.000000e+00> : vector<8x128xf32>
    %67 = tpu.matmul %49, %5, %cst_28 {dimension_numbers = #tpu.dot_dimension_numbers<[1], [0], [0], [1], [0, 0, 1, 1], [], []>} : vector<8x32xf32>, vector<32x128xf32>, vector<8x128xf32> -> vector<8x128xf32>
    %cst_29 = arith.constant dense<0.000000e+00> : vector<8x128xf32>
    %68 = tpu.matmul %30, %3, %cst_29 {dimension_numbers = #tpu.dot_dimension_numbers<[1], [0], [0], [1], [0, 0, 1, 1], [], []>} : vector<8x32xf32>, vector<32x128xf32>, vector<8x128xf32> -> vector<8x128xf32>
    %69 = arith.addf %67, %68 : vector<8x128xf32>
    %70 = vector.broadcast %9 : vector<1x128xf32> to vector<8x128xf32>
    %71 = arith.addf %69, %70 : vector<8x128xf32>
    %72 = math.tanh %71 : vector<8x128xf32>
    %cst_30 = arith.constant 5.000000e-01 : f32
    %73 = vector.broadcast %cst_30 : f32 to vector<8x128xf32>
    %74 = arith.mulf %72, %73 : vector<8x128xf32>
    %cst_31 = arith.constant 5.000000e-01 : f32
    %75 = vector.broadcast %cst_31 : f32 to vector<8x128xf32>
    %76 = arith.addf %74, %75 : vector<8x128xf32>
    %77 = vector.extract_strided_slice %76 {offsets = [0, 0], sizes = [8, 32], strides = [1, 1]} : vector<8x128xf32> to vector<8x32xf32>
    %78 = vector.extract_strided_slice %76 {offsets = [0, 32], sizes = [8, 32], strides = [1, 1]} : vector<8x128xf32> to vector<8x32xf32>
    %79 = vector.extract_strided_slice %76 {offsets = [0, 96], sizes = [8, 32], strides = [1, 1]} : vector<8x128xf32> to vector<8x32xf32>
    %80 = vector.extract_strided_slice %72 {offsets = [0, 64], sizes = [8, 32], strides = [1, 1]} : vector<8x128xf32> to vector<8x32xf32>
    %81 = arith.mulf %78, %32 : vector<8x32xf32>
    %82 = arith.mulf %77, %80 : vector<8x32xf32>
    %83 = arith.addf %81, %82 : vector<8x32xf32>
    %84 = math.tanh %83 : vector<8x32xf32>
    %85 = arith.mulf %79, %84 : vector<8x32xf32>
    %86 = vector.extract_strided_slice %28 {offsets = [16, 0], sizes = [8, 128], strides = [1, 1]} : vector<64x128xf32> to vector<8x128xf32>
    %cst_32 = arith.constant dense<0.000000e+00> : vector<8x128xf32>
    %87 = tpu.matmul %66, %1, %cst_32 {dimension_numbers = #tpu.dot_dimension_numbers<[1], [0], [0], [1], [0, 0, 1, 1], [], []>} : vector<8x32xf32>, vector<32x128xf32>, vector<8x128xf32> -> vector<8x128xf32>
    %88 = arith.addf %86, %87 : vector<8x128xf32>
    %89 = math.tanh %88 : vector<8x128xf32>
    %cst_33 = arith.constant 5.000000e-01 : f32
    %90 = vector.broadcast %cst_33 : f32 to vector<8x128xf32>
    %91 = arith.mulf %89, %90 : vector<8x128xf32>
    %cst_34 = arith.constant 5.000000e-01 : f32
    %92 = vector.broadcast %cst_34 : f32 to vector<8x128xf32>
    %93 = arith.addf %91, %92 : vector<8x128xf32>
    %94 = vector.extract_strided_slice %93 {offsets = [0, 0], sizes = [8, 32], strides = [1, 1]} : vector<8x128xf32> to vector<8x32xf32>
    %95 = vector.extract_strided_slice %93 {offsets = [0, 32], sizes = [8, 32], strides = [1, 1]} : vector<8x128xf32> to vector<8x32xf32>
    %96 = vector.extract_strided_slice %93 {offsets = [0, 96], sizes = [8, 32], strides = [1, 1]} : vector<8x128xf32> to vector<8x32xf32>
    %97 = vector.extract_strided_slice %89 {offsets = [0, 64], sizes = [8, 32], strides = [1, 1]} : vector<8x128xf32> to vector<8x32xf32>
    %98 = arith.mulf %95, %64 : vector<8x32xf32>
    %99 = arith.mulf %94, %97 : vector<8x32xf32>
    %100 = arith.addf %98, %99 : vector<8x32xf32>
    %101 = math.tanh %100 : vector<8x32xf32>
    %102 = arith.mulf %96, %101 : vector<8x32xf32>
    %cst_35 = arith.constant dense<0.000000e+00> : vector<8x128xf32>
    %103 = tpu.matmul %66, %5, %cst_35 {dimension_numbers = #tpu.dot_dimension_numbers<[1], [0], [0], [1], [0, 0, 1, 1], [], []>} : vector<8x32xf32>, vector<32x128xf32>, vector<8x128xf32> -> vector<8x128xf32>
    %cst_36 = arith.constant dense<0.000000e+00> : vector<8x128xf32>
    %104 = tpu.matmul %85, %3, %cst_36 {dimension_numbers = #tpu.dot_dimension_numbers<[1], [0], [0], [1], [0, 0, 1, 1], [], []>} : vector<8x32xf32>, vector<32x128xf32>, vector<8x128xf32> -> vector<8x128xf32>
    %105 = arith.addf %103, %104 : vector<8x128xf32>
    %106 = vector.broadcast %9 : vector<1x128xf32> to vector<8x128xf32>
    %107 = arith.addf %105, %106 : vector<8x128xf32>
    %108 = math.tanh %107 : vector<8x128xf32>
    %cst_37 = arith.constant 5.000000e-01 : f32
    %109 = vector.broadcast %cst_37 : f32 to vector<8x128xf32>
    %110 = arith.mulf %108, %109 : vector<8x128xf32>
    %cst_38 = arith.constant 5.000000e-01 : f32
    %111 = vector.broadcast %cst_38 : f32 to vector<8x128xf32>
    %112 = arith.addf %110, %111 : vector<8x128xf32>
    %113 = vector.extract_strided_slice %112 {offsets = [0, 0], sizes = [8, 32], strides = [1, 1]} : vector<8x128xf32> to vector<8x32xf32>
    %114 = vector.extract_strided_slice %112 {offsets = [0, 32], sizes = [8, 32], strides = [1, 1]} : vector<8x128xf32> to vector<8x32xf32>
    %115 = vector.extract_strided_slice %112 {offsets = [0, 96], sizes = [8, 32], strides = [1, 1]} : vector<8x128xf32> to vector<8x32xf32>
    %116 = vector.extract_strided_slice %108 {offsets = [0, 64], sizes = [8, 32], strides = [1, 1]} : vector<8x128xf32> to vector<8x32xf32>
    %117 = arith.mulf %114, %83 : vector<8x32xf32>
    %118 = arith.mulf %113, %116 : vector<8x32xf32>
    %119 = arith.addf %117, %118 : vector<8x32xf32>
    %120 = math.tanh %119 : vector<8x32xf32>
    %121 = arith.mulf %115, %120 : vector<8x32xf32>
    %122 = vector.extract_strided_slice %28 {offsets = [24, 0], sizes = [8, 128], strides = [1, 1]} : vector<64x128xf32> to vector<8x128xf32>
    %cst_39 = arith.constant dense<0.000000e+00> : vector<8x128xf32>
    %123 = tpu.matmul %102, %1, %cst_39 {dimension_numbers = #tpu.dot_dimension_numbers<[1], [0], [0], [1], [0, 0, 1, 1], [], []>} : vector<8x32xf32>, vector<32x128xf32>, vector<8x128xf32> -> vector<8x128xf32>
    %124 = arith.addf %122, %123 : vector<8x128xf32>
    %125 = math.tanh %124 : vector<8x128xf32>
    %cst_40 = arith.constant 5.000000e-01 : f32
    %126 = vector.broadcast %cst_40 : f32 to vector<8x128xf32>
    %127 = arith.mulf %125, %126 : vector<8x128xf32>
    %cst_41 = arith.constant 5.000000e-01 : f32
    %128 = vector.broadcast %cst_41 : f32 to vector<8x128xf32>
    %129 = arith.addf %127, %128 : vector<8x128xf32>
    %130 = vector.extract_strided_slice %129 {offsets = [0, 0], sizes = [8, 32], strides = [1, 1]} : vector<8x128xf32> to vector<8x32xf32>
    %131 = vector.extract_strided_slice %129 {offsets = [0, 32], sizes = [8, 32], strides = [1, 1]} : vector<8x128xf32> to vector<8x32xf32>
    %132 = vector.extract_strided_slice %129 {offsets = [0, 96], sizes = [8, 32], strides = [1, 1]} : vector<8x128xf32> to vector<8x32xf32>
    %133 = vector.extract_strided_slice %125 {offsets = [0, 64], sizes = [8, 32], strides = [1, 1]} : vector<8x128xf32> to vector<8x32xf32>
    %134 = arith.mulf %131, %100 : vector<8x32xf32>
    %135 = arith.mulf %130, %133 : vector<8x32xf32>
    %136 = arith.addf %134, %135 : vector<8x32xf32>
    %137 = math.tanh %136 : vector<8x32xf32>
    %138 = arith.mulf %132, %137 : vector<8x32xf32>
    %cst_42 = arith.constant dense<0.000000e+00> : vector<8x128xf32>
    %139 = tpu.matmul %102, %5, %cst_42 {dimension_numbers = #tpu.dot_dimension_numbers<[1], [0], [0], [1], [0, 0, 1, 1], [], []>} : vector<8x32xf32>, vector<32x128xf32>, vector<8x128xf32> -> vector<8x128xf32>
    %cst_43 = arith.constant dense<0.000000e+00> : vector<8x128xf32>
    %140 = tpu.matmul %121, %3, %cst_43 {dimension_numbers = #tpu.dot_dimension_numbers<[1], [0], [0], [1], [0, 0, 1, 1], [], []>} : vector<8x32xf32>, vector<32x128xf32>, vector<8x128xf32> -> vector<8x128xf32>
    %141 = arith.addf %139, %140 : vector<8x128xf32>
    %142 = vector.broadcast %9 : vector<1x128xf32> to vector<8x128xf32>
    %143 = arith.addf %141, %142 : vector<8x128xf32>
    %144 = math.tanh %143 : vector<8x128xf32>
    %cst_44 = arith.constant 5.000000e-01 : f32
    %145 = vector.broadcast %cst_44 : f32 to vector<8x128xf32>
    %146 = arith.mulf %144, %145 : vector<8x128xf32>
    %cst_45 = arith.constant 5.000000e-01 : f32
    %147 = vector.broadcast %cst_45 : f32 to vector<8x128xf32>
    %148 = arith.addf %146, %147 : vector<8x128xf32>
    %149 = vector.extract_strided_slice %148 {offsets = [0, 0], sizes = [8, 32], strides = [1, 1]} : vector<8x128xf32> to vector<8x32xf32>
    %150 = vector.extract_strided_slice %148 {offsets = [0, 32], sizes = [8, 32], strides = [1, 1]} : vector<8x128xf32> to vector<8x32xf32>
    %151 = vector.extract_strided_slice %148 {offsets = [0, 96], sizes = [8, 32], strides = [1, 1]} : vector<8x128xf32> to vector<8x32xf32>
    %152 = vector.extract_strided_slice %144 {offsets = [0, 64], sizes = [8, 32], strides = [1, 1]} : vector<8x128xf32> to vector<8x32xf32>
    %153 = arith.mulf %150, %119 : vector<8x32xf32>
    %154 = arith.mulf %149, %152 : vector<8x32xf32>
    %155 = arith.addf %153, %154 : vector<8x32xf32>
    %156 = math.tanh %155 : vector<8x32xf32>
    %157 = arith.mulf %151, %156 : vector<8x32xf32>
    %158 = vector.extract_strided_slice %28 {offsets = [32, 0], sizes = [8, 128], strides = [1, 1]} : vector<64x128xf32> to vector<8x128xf32>
    %cst_46 = arith.constant dense<0.000000e+00> : vector<8x128xf32>
    %159 = tpu.matmul %138, %1, %cst_46 {dimension_numbers = #tpu.dot_dimension_numbers<[1], [0], [0], [1], [0, 0, 1, 1], [], []>} : vector<8x32xf32>, vector<32x128xf32>, vector<8x128xf32> -> vector<8x128xf32>
    %160 = arith.addf %158, %159 : vector<8x128xf32>
    %161 = math.tanh %160 : vector<8x128xf32>
    %cst_47 = arith.constant 5.000000e-01 : f32
    %162 = vector.broadcast %cst_47 : f32 to vector<8x128xf32>
    %163 = arith.mulf %161, %162 : vector<8x128xf32>
    %cst_48 = arith.constant 5.000000e-01 : f32
    %164 = vector.broadcast %cst_48 : f32 to vector<8x128xf32>
    %165 = arith.addf %163, %164 : vector<8x128xf32>
    %166 = vector.extract_strided_slice %165 {offsets = [0, 0], sizes = [8, 32], strides = [1, 1]} : vector<8x128xf32> to vector<8x32xf32>
    %167 = vector.extract_strided_slice %165 {offsets = [0, 32], sizes = [8, 32], strides = [1, 1]} : vector<8x128xf32> to vector<8x32xf32>
    %168 = vector.extract_strided_slice %165 {offsets = [0, 96], sizes = [8, 32], strides = [1, 1]} : vector<8x128xf32> to vector<8x32xf32>
    %169 = vector.extract_strided_slice %161 {offsets = [0, 64], sizes = [8, 32], strides = [1, 1]} : vector<8x128xf32> to vector<8x32xf32>
    %170 = arith.mulf %167, %136 : vector<8x32xf32>
    %171 = arith.mulf %166, %169 : vector<8x32xf32>
    %172 = arith.addf %170, %171 : vector<8x32xf32>
    %173 = math.tanh %172 : vector<8x32xf32>
    %174 = arith.mulf %168, %173 : vector<8x32xf32>
    %cst_49 = arith.constant dense<0.000000e+00> : vector<8x128xf32>
    %175 = tpu.matmul %138, %5, %cst_49 {dimension_numbers = #tpu.dot_dimension_numbers<[1], [0], [0], [1], [0, 0, 1, 1], [], []>} : vector<8x32xf32>, vector<32x128xf32>, vector<8x128xf32> -> vector<8x128xf32>
    %cst_50 = arith.constant dense<0.000000e+00> : vector<8x128xf32>
    %176 = tpu.matmul %157, %3, %cst_50 {dimension_numbers = #tpu.dot_dimension_numbers<[1], [0], [0], [1], [0, 0, 1, 1], [], []>} : vector<8x32xf32>, vector<32x128xf32>, vector<8x128xf32> -> vector<8x128xf32>
    %177 = arith.addf %175, %176 : vector<8x128xf32>
    %178 = vector.broadcast %9 : vector<1x128xf32> to vector<8x128xf32>
    %179 = arith.addf %177, %178 : vector<8x128xf32>
    %180 = math.tanh %179 : vector<8x128xf32>
    %cst_51 = arith.constant 5.000000e-01 : f32
    %181 = vector.broadcast %cst_51 : f32 to vector<8x128xf32>
    %182 = arith.mulf %180, %181 : vector<8x128xf32>
    %cst_52 = arith.constant 5.000000e-01 : f32
    %183 = vector.broadcast %cst_52 : f32 to vector<8x128xf32>
    %184 = arith.addf %182, %183 : vector<8x128xf32>
    %185 = vector.extract_strided_slice %184 {offsets = [0, 0], sizes = [8, 32], strides = [1, 1]} : vector<8x128xf32> to vector<8x32xf32>
    %186 = vector.extract_strided_slice %184 {offsets = [0, 32], sizes = [8, 32], strides = [1, 1]} : vector<8x128xf32> to vector<8x32xf32>
    %187 = vector.extract_strided_slice %184 {offsets = [0, 96], sizes = [8, 32], strides = [1, 1]} : vector<8x128xf32> to vector<8x32xf32>
    %188 = vector.extract_strided_slice %180 {offsets = [0, 64], sizes = [8, 32], strides = [1, 1]} : vector<8x128xf32> to vector<8x32xf32>
    %189 = arith.mulf %186, %155 : vector<8x32xf32>
    %190 = arith.mulf %185, %188 : vector<8x32xf32>
    %191 = arith.addf %189, %190 : vector<8x32xf32>
    %192 = math.tanh %191 : vector<8x32xf32>
    %193 = arith.mulf %187, %192 : vector<8x32xf32>
    %194 = vector.extract_strided_slice %28 {offsets = [40, 0], sizes = [8, 128], strides = [1, 1]} : vector<64x128xf32> to vector<8x128xf32>
    %cst_53 = arith.constant dense<0.000000e+00> : vector<8x128xf32>
    %195 = tpu.matmul %174, %1, %cst_53 {dimension_numbers = #tpu.dot_dimension_numbers<[1], [0], [0], [1], [0, 0, 1, 1], [], []>} : vector<8x32xf32>, vector<32x128xf32>, vector<8x128xf32> -> vector<8x128xf32>
    %196 = arith.addf %194, %195 : vector<8x128xf32>
    %197 = math.tanh %196 : vector<8x128xf32>
    %cst_54 = arith.constant 5.000000e-01 : f32
    %198 = vector.broadcast %cst_54 : f32 to vector<8x128xf32>
    %199 = arith.mulf %197, %198 : vector<8x128xf32>
    %cst_55 = arith.constant 5.000000e-01 : f32
    %200 = vector.broadcast %cst_55 : f32 to vector<8x128xf32>
    %201 = arith.addf %199, %200 : vector<8x128xf32>
    %202 = vector.extract_strided_slice %201 {offsets = [0, 0], sizes = [8, 32], strides = [1, 1]} : vector<8x128xf32> to vector<8x32xf32>
    %203 = vector.extract_strided_slice %201 {offsets = [0, 32], sizes = [8, 32], strides = [1, 1]} : vector<8x128xf32> to vector<8x32xf32>
    %204 = vector.extract_strided_slice %201 {offsets = [0, 96], sizes = [8, 32], strides = [1, 1]} : vector<8x128xf32> to vector<8x32xf32>
    %205 = vector.extract_strided_slice %197 {offsets = [0, 64], sizes = [8, 32], strides = [1, 1]} : vector<8x128xf32> to vector<8x32xf32>
    %206 = arith.mulf %203, %172 : vector<8x32xf32>
    %207 = arith.mulf %202, %205 : vector<8x32xf32>
    %208 = arith.addf %206, %207 : vector<8x32xf32>
    %209 = math.tanh %208 : vector<8x32xf32>
    %210 = arith.mulf %204, %209 : vector<8x32xf32>
    %cst_56 = arith.constant dense<0.000000e+00> : vector<8x128xf32>
    %211 = tpu.matmul %174, %5, %cst_56 {dimension_numbers = #tpu.dot_dimension_numbers<[1], [0], [0], [1], [0, 0, 1, 1], [], []>} : vector<8x32xf32>, vector<32x128xf32>, vector<8x128xf32> -> vector<8x128xf32>
    %cst_57 = arith.constant dense<0.000000e+00> : vector<8x128xf32>
    %212 = tpu.matmul %193, %3, %cst_57 {dimension_numbers = #tpu.dot_dimension_numbers<[1], [0], [0], [1], [0, 0, 1, 1], [], []>} : vector<8x32xf32>, vector<32x128xf32>, vector<8x128xf32> -> vector<8x128xf32>
    %213 = arith.addf %211, %212 : vector<8x128xf32>
    %214 = vector.broadcast %9 : vector<1x128xf32> to vector<8x128xf32>
    %215 = arith.addf %213, %214 : vector<8x128xf32>
    %216 = math.tanh %215 : vector<8x128xf32>
    %cst_58 = arith.constant 5.000000e-01 : f32
    %217 = vector.broadcast %cst_58 : f32 to vector<8x128xf32>
    %218 = arith.mulf %216, %217 : vector<8x128xf32>
    %cst_59 = arith.constant 5.000000e-01 : f32
    %219 = vector.broadcast %cst_59 : f32 to vector<8x128xf32>
    %220 = arith.addf %218, %219 : vector<8x128xf32>
    %221 = vector.extract_strided_slice %220 {offsets = [0, 0], sizes = [8, 32], strides = [1, 1]} : vector<8x128xf32> to vector<8x32xf32>
    %222 = vector.extract_strided_slice %220 {offsets = [0, 32], sizes = [8, 32], strides = [1, 1]} : vector<8x128xf32> to vector<8x32xf32>
    %223 = vector.extract_strided_slice %220 {offsets = [0, 96], sizes = [8, 32], strides = [1, 1]} : vector<8x128xf32> to vector<8x32xf32>
    %224 = vector.extract_strided_slice %216 {offsets = [0, 64], sizes = [8, 32], strides = [1, 1]} : vector<8x128xf32> to vector<8x32xf32>
    %225 = arith.mulf %222, %191 : vector<8x32xf32>
    %226 = arith.mulf %221, %224 : vector<8x32xf32>
    %227 = arith.addf %225, %226 : vector<8x32xf32>
    %228 = math.tanh %227 : vector<8x32xf32>
    %229 = arith.mulf %223, %228 : vector<8x32xf32>
    %230 = vector.extract_strided_slice %28 {offsets = [48, 0], sizes = [8, 128], strides = [1, 1]} : vector<64x128xf32> to vector<8x128xf32>
    %cst_60 = arith.constant dense<0.000000e+00> : vector<8x128xf32>
    %231 = tpu.matmul %210, %1, %cst_60 {dimension_numbers = #tpu.dot_dimension_numbers<[1], [0], [0], [1], [0, 0, 1, 1], [], []>} : vector<8x32xf32>, vector<32x128xf32>, vector<8x128xf32> -> vector<8x128xf32>
    %232 = arith.addf %230, %231 : vector<8x128xf32>
    %233 = math.tanh %232 : vector<8x128xf32>
    %cst_61 = arith.constant 5.000000e-01 : f32
    %234 = vector.broadcast %cst_61 : f32 to vector<8x128xf32>
    %235 = arith.mulf %233, %234 : vector<8x128xf32>
    %cst_62 = arith.constant 5.000000e-01 : f32
    %236 = vector.broadcast %cst_62 : f32 to vector<8x128xf32>
    %237 = arith.addf %235, %236 : vector<8x128xf32>
    %238 = vector.extract_strided_slice %237 {offsets = [0, 0], sizes = [8, 32], strides = [1, 1]} : vector<8x128xf32> to vector<8x32xf32>
    %239 = vector.extract_strided_slice %237 {offsets = [0, 32], sizes = [8, 32], strides = [1, 1]} : vector<8x128xf32> to vector<8x32xf32>
    %240 = vector.extract_strided_slice %237 {offsets = [0, 96], sizes = [8, 32], strides = [1, 1]} : vector<8x128xf32> to vector<8x32xf32>
    %241 = vector.extract_strided_slice %233 {offsets = [0, 64], sizes = [8, 32], strides = [1, 1]} : vector<8x128xf32> to vector<8x32xf32>
    %242 = arith.mulf %239, %208 : vector<8x32xf32>
    %243 = arith.mulf %238, %241 : vector<8x32xf32>
    %244 = arith.addf %242, %243 : vector<8x32xf32>
    %245 = math.tanh %244 : vector<8x32xf32>
    %246 = arith.mulf %240, %245 : vector<8x32xf32>
    %cst_63 = arith.constant dense<0.000000e+00> : vector<8x128xf32>
    %247 = tpu.matmul %210, %5, %cst_63 {dimension_numbers = #tpu.dot_dimension_numbers<[1], [0], [0], [1], [0, 0, 1, 1], [], []>} : vector<8x32xf32>, vector<32x128xf32>, vector<8x128xf32> -> vector<8x128xf32>
    %cst_64 = arith.constant dense<0.000000e+00> : vector<8x128xf32>
    %248 = tpu.matmul %229, %3, %cst_64 {dimension_numbers = #tpu.dot_dimension_numbers<[1], [0], [0], [1], [0, 0, 1, 1], [], []>} : vector<8x32xf32>, vector<32x128xf32>, vector<8x128xf32> -> vector<8x128xf32>
    %249 = arith.addf %247, %248 : vector<8x128xf32>
    %250 = vector.broadcast %9 : vector<1x128xf32> to vector<8x128xf32>
    %251 = arith.addf %249, %250 : vector<8x128xf32>
    %252 = math.tanh %251 : vector<8x128xf32>
    %cst_65 = arith.constant 5.000000e-01 : f32
    %253 = vector.broadcast %cst_65 : f32 to vector<8x128xf32>
    %254 = arith.mulf %252, %253 : vector<8x128xf32>
    %cst_66 = arith.constant 5.000000e-01 : f32
    %255 = vector.broadcast %cst_66 : f32 to vector<8x128xf32>
    %256 = arith.addf %254, %255 : vector<8x128xf32>
    %257 = vector.extract_strided_slice %256 {offsets = [0, 0], sizes = [8, 32], strides = [1, 1]} : vector<8x128xf32> to vector<8x32xf32>
    %258 = vector.extract_strided_slice %256 {offsets = [0, 32], sizes = [8, 32], strides = [1, 1]} : vector<8x128xf32> to vector<8x32xf32>
    %259 = vector.extract_strided_slice %256 {offsets = [0, 96], sizes = [8, 32], strides = [1, 1]} : vector<8x128xf32> to vector<8x32xf32>
    %260 = vector.extract_strided_slice %252 {offsets = [0, 64], sizes = [8, 32], strides = [1, 1]} : vector<8x128xf32> to vector<8x32xf32>
    %261 = arith.mulf %258, %227 : vector<8x32xf32>
    %262 = arith.mulf %257, %260 : vector<8x32xf32>
    %263 = arith.addf %261, %262 : vector<8x32xf32>
    %264 = math.tanh %263 : vector<8x32xf32>
    %265 = arith.mulf %259, %264 : vector<8x32xf32>
    %266 = vector.extract_strided_slice %28 {offsets = [56, 0], sizes = [8, 128], strides = [1, 1]} : vector<64x128xf32> to vector<8x128xf32>
    %cst_67 = arith.constant dense<0.000000e+00> : vector<8x128xf32>
    %267 = tpu.matmul %246, %1, %cst_67 {dimension_numbers = #tpu.dot_dimension_numbers<[1], [0], [0], [1], [0, 0, 1, 1], [], []>} : vector<8x32xf32>, vector<32x128xf32>, vector<8x128xf32> -> vector<8x128xf32>
    %268 = arith.addf %266, %267 : vector<8x128xf32>
    %269 = math.tanh %268 : vector<8x128xf32>
    %cst_68 = arith.constant 5.000000e-01 : f32
    %270 = vector.broadcast %cst_68 : f32 to vector<8x128xf32>
    %271 = arith.mulf %269, %270 : vector<8x128xf32>
    %cst_69 = arith.constant 5.000000e-01 : f32
    %272 = vector.broadcast %cst_69 : f32 to vector<8x128xf32>
    %273 = arith.addf %271, %272 : vector<8x128xf32>
    %274 = vector.extract_strided_slice %273 {offsets = [0, 0], sizes = [8, 32], strides = [1, 1]} : vector<8x128xf32> to vector<8x32xf32>
    %275 = vector.extract_strided_slice %273 {offsets = [0, 32], sizes = [8, 32], strides = [1, 1]} : vector<8x128xf32> to vector<8x32xf32>
    %276 = vector.extract_strided_slice %273 {offsets = [0, 96], sizes = [8, 32], strides = [1, 1]} : vector<8x128xf32> to vector<8x32xf32>
    %277 = vector.extract_strided_slice %269 {offsets = [0, 64], sizes = [8, 32], strides = [1, 1]} : vector<8x128xf32> to vector<8x32xf32>
    %278 = arith.mulf %275, %244 : vector<8x32xf32>
    %279 = arith.mulf %274, %277 : vector<8x32xf32>
    %280 = arith.addf %278, %279 : vector<8x32xf32>
    %281 = math.tanh %280 : vector<8x32xf32>
    %282 = arith.mulf %276, %281 : vector<8x32xf32>
    %cst_70 = arith.constant dense<0.000000e+00> : vector<8x128xf32>
    %283 = tpu.matmul %246, %5, %cst_70 {dimension_numbers = #tpu.dot_dimension_numbers<[1], [0], [0], [1], [0, 0, 1, 1], [], []>} : vector<8x32xf32>, vector<32x128xf32>, vector<8x128xf32> -> vector<8x128xf32>
    %cst_71 = arith.constant dense<0.000000e+00> : vector<8x128xf32>
    %284 = tpu.matmul %265, %3, %cst_71 {dimension_numbers = #tpu.dot_dimension_numbers<[1], [0], [0], [1], [0, 0, 1, 1], [], []>} : vector<8x32xf32>, vector<32x128xf32>, vector<8x128xf32> -> vector<8x128xf32>
    %285 = arith.addf %283, %284 : vector<8x128xf32>
    %286 = vector.broadcast %9 : vector<1x128xf32> to vector<8x128xf32>
    %287 = arith.addf %285, %286 : vector<8x128xf32>
    %288 = math.tanh %287 : vector<8x128xf32>
    %cst_72 = arith.constant 5.000000e-01 : f32
    %289 = vector.broadcast %cst_72 : f32 to vector<8x128xf32>
    %290 = arith.mulf %288, %289 : vector<8x128xf32>
    %cst_73 = arith.constant 5.000000e-01 : f32
    %291 = vector.broadcast %cst_73 : f32 to vector<8x128xf32>
    %292 = arith.addf %290, %291 : vector<8x128xf32>
    %293 = vector.extract_strided_slice %292 {offsets = [0, 0], sizes = [8, 32], strides = [1, 1]} : vector<8x128xf32> to vector<8x32xf32>
    %294 = vector.extract_strided_slice %292 {offsets = [0, 32], sizes = [8, 32], strides = [1, 1]} : vector<8x128xf32> to vector<8x32xf32>
    %295 = vector.extract_strided_slice %292 {offsets = [0, 96], sizes = [8, 32], strides = [1, 1]} : vector<8x128xf32> to vector<8x32xf32>
    %296 = vector.extract_strided_slice %288 {offsets = [0, 64], sizes = [8, 32], strides = [1, 1]} : vector<8x128xf32> to vector<8x32xf32>
    %297 = arith.mulf %294, %263 : vector<8x32xf32>
    %298 = arith.mulf %293, %296 : vector<8x32xf32>
    %299 = arith.addf %297, %298 : vector<8x32xf32>
    %300 = math.tanh %299 : vector<8x32xf32>
    %301 = arith.mulf %295, %300 : vector<8x32xf32>
    %cst_74 = arith.constant dense<0.000000e+00> : vector<8x128xf32>
    %302 = tpu.matmul %282, %5, %cst_74 {dimension_numbers = #tpu.dot_dimension_numbers<[1], [0], [0], [1], [0, 0, 1, 1], [], []>} : vector<8x32xf32>, vector<32x128xf32>, vector<8x128xf32> -> vector<8x128xf32>
    %cst_75 = arith.constant dense<0.000000e+00> : vector<8x128xf32>
    %303 = tpu.matmul %301, %3, %cst_75 {dimension_numbers = #tpu.dot_dimension_numbers<[1], [0], [0], [1], [0, 0, 1, 1], [], []>} : vector<8x32xf32>, vector<32x128xf32>, vector<8x128xf32> -> vector<8x128xf32>
    %304 = arith.addf %302, %303 : vector<8x128xf32>
    %305 = vector.broadcast %9 : vector<1x128xf32> to vector<8x128xf32>
    %306 = arith.addf %304, %305 : vector<8x128xf32>
    %307 = math.tanh %306 : vector<8x128xf32>
    %cst_76 = arith.constant 5.000000e-01 : f32
    %308 = vector.broadcast %cst_76 : f32 to vector<8x128xf32>
    %309 = arith.mulf %307, %308 : vector<8x128xf32>
    %cst_77 = arith.constant 5.000000e-01 : f32
    %310 = vector.broadcast %cst_77 : f32 to vector<8x128xf32>
    %311 = arith.addf %309, %310 : vector<8x128xf32>
    %312 = vector.extract_strided_slice %311 {offsets = [0, 0], sizes = [8, 32], strides = [1, 1]} : vector<8x128xf32> to vector<8x32xf32>
    %313 = vector.extract_strided_slice %311 {offsets = [0, 32], sizes = [8, 32], strides = [1, 1]} : vector<8x128xf32> to vector<8x32xf32>
    %314 = vector.extract_strided_slice %311 {offsets = [0, 96], sizes = [8, 32], strides = [1, 1]} : vector<8x128xf32> to vector<8x32xf32>
    %315 = vector.extract_strided_slice %307 {offsets = [0, 64], sizes = [8, 32], strides = [1, 1]} : vector<8x128xf32> to vector<8x32xf32>
    %316 = arith.mulf %313, %299 : vector<8x32xf32>
    %317 = arith.mulf %312, %315 : vector<8x32xf32>
    %318 = arith.addf %316, %317 : vector<8x32xf32>
    %319 = math.tanh %318 : vector<8x32xf32>
    %320 = arith.mulf %314, %319 : vector<8x32xf32>
    %c0_78 = arith.constant 0 : index
    %c0_79 = arith.constant 0 : index
    %321 = vector.load %arg5[%c0_78, %c0_79] : memref<1x32xf32, #tpu.memory_space<vmem>>, vector<1x32xf32>
    %322 = vector.broadcast %321 : vector<1x32xf32> to vector<8x32xf32>
    %323 = arith.mulf %320, %322 : vector<8x32xf32>
    %cst_80 = arith.constant dense<0.000000e+00> : vector<8xf32>
    %324 = vector.multi_reduction <add>, %323, %cst_80 [1] : vector<8x32xf32> to vector<8xf32>
    %325 = vector.shape_cast %324 : vector<8xf32> to vector<8x1xf32>
    %c0_81 = arith.constant 0 : index
    %c0_82 = arith.constant 0 : index
    %326 = vector.load %arg6[%c0_81, %c0_82] : memref<8x1xf32, #tpu.memory_space<vmem>>, vector<8x1xf32>
    tpu.vector_store %arg6[%c0_81, %c0_82], %325 {strides = array<i32>} : memref<8x1xf32, #tpu.memory_space<vmem>>, vector<8x1xf32>,
    return
  }
}

</mosaic_0001>

<llo_original>
// kernel: tpu_custom_call.1
$region0: #{tpu_custom_call.1}
  #allocation0 [shape = 'u32[]', space=smem, size = 0x4, offset = 0x4, fixed_abs, tag = 'smem constant byte address 0x4 - core index']
  #allocation1 [shape = 'u32[144,128]{1,0:T(1,128)}', space=vmem, size = 0x12000, scoped, tag = 'internal scratch']
  %s0 = inlined_call_operand.vmem [shape: s32[2,64,1], index: 0, kind: input, shape index: {}]
  %s1 = inlined_call_operand.hbm [shape: f32[8,128], index: 1, kind: input, shape index: {}]
  %s2 = inlined_call_operand.vmem [shape: f32[2,32,128], index: 2, kind: input, shape index: {}]
  %s3 = inlined_call_operand.vmem [shape: f32[2,32,128], index: 3, kind: input, shape index: {}]
  %s4 = inlined_call_operand.vmem [shape: f32[2,1,128], index: 4, kind: input, shape index: {}]
  %s5 = inlined_call_operand.vmem [shape: f32[1,32], index: 5, kind: input, shape index: {}]
  %s6 = inlined_call_operand.vmem [shape: f32[8,1], index: 6, kind: output, shape index: {}]
  %s7 = sld [smem:[#allocation0]]
  $region38: #{tpu_custom_call.1} parent=0
    _
  %s9 = ssub.s32 1, %s7
  %s10 = scalar_select 0, %s9, %s7
  $region1: #{tpu_custom_call.1} parent=0
    #allocation2 [shape = 'u8[4096]{0}', space=vmem, size = 0x1000, scoped, tag = 'input window, operand 1, single buffered']
    #allocation3 [shape = 's32[1]{0}', space=sflag, size = 0x4, scoped, tag = 'scoped memory for tpu_custom_call.1']
    %11 = vsyncpa [#allocation3], 0
    // Predicated region
    $region2: #{tpu_custom_call.1} parent=1 // pred_check
      _
    $region3: #{tpu_custom_call.1} parent=1 // pred_check_branch
      %13 = sbr.rel (0) target = $region5
    $region4: #{tpu_custom_call.1} parent=1 // pred_region
      _
    $region5: #{tpu_custom_call.1} parent=1 // pred_fallthru
      _
    // Predicated region
    $region6: #{tpu_custom_call.1} parent=1 // pred_check
      _
    $region7: #{tpu_custom_call.1} parent=1 // pred_check_branch
      %15 = sbr.rel (0) target = $region9
    $region8: #{tpu_custom_call.1} parent=1 // pred_region
      %s17 = ssub.s32 128, 128
      %18 = vsyncadd [#allocation3], %s17
      %s20 = sshll.u32 [#allocation2], 4
      %s21 = int_to_ptr.vmem [resolvable:$true] %s20
      %23 = dma.hbm_to_vmem [thread:$0]  %s1, 128, %s21, [#allocation3]
    $region9: #{tpu_custom_call.1} parent=1 // pred_fallthru
      _
    // Predicated region
    $region10: #{tpu_custom_call.1} parent=1 // pred_check
      _
    $region11: #{tpu_custom_call.1} parent=1 // pred_check_branch
      %25 = sbr.rel (0) target = $region13
    $region12: #{tpu_custom_call.1} parent=1 // pred_region
      _
    $region13: #{tpu_custom_call.1} parent=1 // pred_fallthru
      _
    // Predicated region
    $region14: #{tpu_custom_call.1} parent=1 // pred_check
      _
    $region15: #{tpu_custom_call.1} parent=1 // pred_check_branch
      %27 = sbr.rel (0) target = $region17
    $region16: #{tpu_custom_call.1} parent=1 // pred_region
      _
    $region17: #{tpu_custom_call.1} parent=1 // pred_fallthru
      _
    // Predicated region
    $region18: #{tpu_custom_call.1} parent=1 // pred_check
      _
    $region19: #{tpu_custom_call.1} parent=1 // pred_check_branch
      %29 = sbr.rel (0) target = $region21
    $region20: #{tpu_custom_call.1} parent=1 // pred_region
      _
    $region21: #{tpu_custom_call.1} parent=1 // pred_fallthru
      _
    // Predicated region
    $region22: #{tpu_custom_call.1} parent=1 // pred_check
      _
    $region23: #{tpu_custom_call.1} parent=1 // pred_check_branch
      %31 = sbr.rel (0) target = $region25
    $region24: #{tpu_custom_call.1} parent=1 // pred_region
      _
    $region25: #{tpu_custom_call.1} parent=1 // pred_fallthru
      _
    // Predicated region
    $region26: #{tpu_custom_call.1} parent=1 // pred_check
      _
    $region27: #{tpu_custom_call.1} parent=1 // pred_check_branch
      %33 = sbr.rel (0) target = $region29
    $region28: #{tpu_custom_call.1} parent=1 // pred_region
      %34 = dma.done [#allocation3], 128
    $region29: #{tpu_custom_call.1} parent=1 // pred_fallthru
      _
    %v35 = vld [vmem:[%s3] sm:$0xff]
    %v36 = vld [vmem:[%s3 + $0x8] sm:$0xff]
    %v37 = vld [vmem:[%s3 + $0x10] sm:$0xff]
    %v38 = vld [vmem:[%s3 + $0x18] sm:$0xff]
    %s39 = scalar_lea.vmem %s3, 32
    %v40 = vld [vmem:[%s39] sm:$0xff]
    %v41 = vld [vmem:[%s39 + $0x8] sm:$0xff]
    %v42 = vld [vmem:[%s39 + $0x10] sm:$0xff]
    %v43 = vld [vmem:[%s39 + $0x18] sm:$0xff]
    %s44 = scalar_lea.vmem %s2, 32
    %v45 = vld [vmem:[%s44] sm:$0xff]
    %v46 = vld [vmem:[%s44 + $0x8] sm:$0xff]
    %v47 = vld [vmem:[%s44 + $0x10] sm:$0xff]
    %v48 = vld [vmem:[%s44 + $0x18] sm:$0xff]
    %v49 = vld [vmem:[%s4] sm:$0x1]
    %s50 = scalar_lea.vmem %s4, 1
    %v51 = vld [vmem:[%s50] sm:$0x1]
    %v52 = vld [vmem:[%s0] sm:$0xff]
    %v53 = vld [vmem:[%s0 + $0x8] sm:$0xff]
    %v54 = vld [vmem:[%s0 + $0x10] sm:$0xff]
    %v55 = vld [vmem:[%s0 + $0x18] sm:$0xff]
    %v56 = vld [vmem:[%s0 + $0x20] sm:$0xff]
    %v57 = vld [vmem:[%s0 + $0x28] sm:$0xff]
    %v58 = vld [vmem:[%s0 + $0x30] sm:$0xff]
    %v59 = vld [vmem:[%s0 + $0x38] sm:$0xff]
    %v60 = vld [vmem:[%s0 + $0x40] sm:$0xff]
    %v61 = vld [vmem:[%s0 + $0x48] sm:$0xff]
    %v62 = vld [vmem:[%s0 + $0x50] sm:$0xff]
    %v63 = vld [vmem:[%s0 + $0x58] sm:$0xff]
    %v64 = vld [vmem:[%s0 + $0x60] sm:$0xff]
    %v65 = vld [vmem:[%s0 + $0x68] sm:$0xff]
    %v66 = vld [vmem:[%s0 + $0x70] sm:$0xff]
    %v67 = vld [vmem:[%s0 + $0x78] sm:$0xff]
    %v68 = vlaneseq
    %v69 = vand.u32 %v68, 127
    %70 = vset.pattern.permute.xlu0 0
    %71 = vperm.xlu0 %70, %v52
    %v72 = vpop.permute.xlu0 %71
    %73 = vset.pattern.permute.xlu0 0
    %74 = vperm.xlu0 %73, %v53
    %v75 = vpop.permute.xlu0 %74
    %76 = vset.pattern.permute.xlu0 0
    %77 = vperm.xlu0 %76, %v54
    %v78 = vpop.permute.xlu0 %77
    %79 = vset.pattern.permute.xlu0 0
    %80 = vperm.xlu0 %79, %v55
    %v81 = vpop.permute.xlu0 %80
    %82 = vset.pattern.permute.xlu0 0
    %83 = vperm.xlu0 %82, %v56
    %v84 = vpop.permute.xlu0 %83
    %85 = vset.pattern.permute.xlu0 0
    %86 = vperm.xlu0 %85, %v57
    %v87 = vpop.permute.xlu0 %86
    %88 = vset.pattern.permute.xlu0 0
    %89 = vperm.xlu0 %88, %v58
    %v90 = vpop.permute.xlu0 %89
    %91 = vset.pattern.permute.xlu0 0
    %92 = vperm.xlu0 %91, %v59
    %v93 = vpop.permute.xlu0 %92
    %vm94 = vcmp.eq.s32.totalorder %v72, %v69
    %vm95 = vcmp.eq.s32.totalorder %v75, %v69
    %vm96 = vcmp.eq.s32.totalorder %v78, %v69
    %vm97 = vcmp.eq.s32.totalorder %v81, %v69
    %vm98 = vcmp.eq.s32.totalorder %v84, %v69
    %vm99 = vcmp.eq.s32.totalorder %v87, %v69
    %vm100 = vcmp.eq.s32.totalorder %v90, %v69
    %vm101 = vcmp.eq.s32.totalorder %v93, %v69
    %v102 = vsel %vm94, 1, 0
    %v103 = vsel %vm95, 1, 0
    %v104 = vsel %vm96, 1, 0
    %v105 = vsel %vm97, 1, 0
    %v106 = vsel %vm98, 1, 0
    %v107 = vsel %vm99, 1, 0
    %v108 = vsel %vm100, 1, 0
    %v109 = vsel %vm101, 1, 0
    %v110 = vcvt.s32.f32 %v102
    %v111 = vcvt.s32.f32 %v103
    %v112 = vcvt.s32.f32 %v104
    %v113 = vcvt.s32.f32 %v105
    %v114 = vcvt.s32.f32 %v106
    %v115 = vcvt.s32.f32 %v107
    %v116 = vcvt.s32.f32 %v108
    %v117 = vcvt.s32.f32 %v109
    %118 = vset.pattern.permute.xlu0 0
    %119 = vperm.xlu0 %118, %v60
    %v120 = vpop.permute.xlu0 %119
    %121 = vset.pattern.permute.xlu0 0
    %122 = vperm.xlu0 %121, %v61
    %v123 = vpop.permute.xlu0 %122
    %124 = vset.pattern.permute.xlu0 0
    %125 = vperm.xlu0 %124, %v62
    %v126 = vpop.permute.xlu0 %125
    %127 = vset.pattern.permute.xlu0 0
    %128 = vperm.xlu0 %127, %v63
    %v129 = vpop.permute.xlu0 %128
    %130 = vset.pattern.permute.xlu0 0
    %131 = vperm.xlu0 %130, %v64
    %v132 = vpop.permute.xlu0 %131
    %133 = vset.pattern.permute.xlu0 0
    %134 = vperm.xlu0 %133, %v65
    %v135 = vpop.permute.xlu0 %134
    %136 = vset.pattern.permute.xlu0 0
    %137 = vperm.xlu0 %136, %v66
    %v138 = vpop.permute.xlu0 %137
    %139 = vset.pattern.permute.xlu0 0
    %140 = vperm.xlu0 %139, %v67
    %v141 = vpop.permute.xlu0 %140
    %vm142 = vcmp.eq.s32.totalorder %v120, %v69
    %vm143 = vcmp.eq.s32.totalorder %v123, %v69
    %vm144 = vcmp.eq.s32.totalorder %v126, %v69
    %vm145 = vcmp.eq.s32.totalorder %v129, %v69
    %vm146 = vcmp.eq.s32.totalorder %v132, %v69
    %vm147 = vcmp.eq.s32.totalorder %v135, %v69
    %vm148 = vcmp.eq.s32.totalorder %v138, %v69
    %vm149 = vcmp.eq.s32.totalorder %v141, %v69
    %v150 = vsel %vm142, 1, 0
    %v151 = vsel %vm143, 1, 0
    %v152 = vsel %vm144, 1, 0
    %v153 = vsel %vm145, 1, 0
    %v154 = vsel %vm146, 1, 0
    %v155 = vsel %vm147, 1, 0
    %v156 = vsel %vm148, 1, 0
    %v157 = vsel %vm149, 1, 0
    %v158 = vcvt.s32.f32 %v150
    %v159 = vcvt.s32.f32 %v151
    %v160 = vcvt.s32.f32 %v152
    %v161 = vcvt.s32.f32 %v153
    %v162 = vcvt.s32.f32 %v154
    %v163 = vcvt.s32.f32 %v155
    %v164 = vcvt.s32.f32 %v156
    %v165 = vcvt.s32.f32 %v157
    %v166 = vadd.f32 %v110, %v158
    %v167 = vadd.f32 %v111, %v159
    %v168 = vadd.f32 %v112, %v160
    %v169 = vadd.f32 %v113, %v161
    %v170 = vadd.f32 %v114, %v162
    %v171 = vadd.f32 %v115, %v163
    %v172 = vadd.f32 %v116, %v164
    %v173 = vadd.f32 %v117, %v165
    %v174 = vld [vmem:[#allocation2] sm:$0xff]
    %v176 = vlaneseq
    %v177 = vshrl.u32 %v176, 7
    %v178 = vsub.s32 0, %v177
    %v179 = vrot.slane %v49, %v178
    %vm181 = vcmask 64512
    %v183 = vsel %vm181, %v166, 0
    %v186 = vsel %vm181, %v167, 0
    %v189 = vsel %vm181, %v168, 0
    %v192 = vsel %vm181, %v169, 0
    %v195 = vsel %vm181, %v170, 0
    %v198 = vsel %vm181, %v171, 0
    %v201 = vsel %vm181, %v172, 0
    %v204 = vsel %vm181, %v173, 0
    %206 = vmatprep.subr.mxu0 0.0
    %207 = vmatpush1.msra.mxu0 0.0
    %208 = vmatprep.subr.mxu0 0.0
    %209 = vmatpush1.msra.mxu0 0.0
    %210 = vmatprep.subr.mxu0 0.0
    %211 = vmatpush1.msra.mxu0 0.0
    %212 = vmatprep.subr.mxu0 0.0
    %213 = vmatpush1.msra.mxu0 0.0
    %214 = vmatprep.subr.mxu0 0.0
    %215 = vmatpush1.msra.mxu0 0.0
    %216 = vmatprep.subr.mxu0 0.0
    %217 = vmatpush1.msra.mxu0 0.0
    %218 = vmatprep.subr.mxu0 0.0
    %219 = vmatpush1.msra.mxu0 0.0
    %220 = vmatprep.subr.mxu0 0.0
    %221 = vmatpush1.msra.mxu0 0.0
    %222 = vmatprep.subr.mxu0 0.0
    %223 = vmatpush1.msra.mxu0 0.0
    %224 = vmatprep.subr.mxu0 0.0
    %225 = vmatpush1.msra.mxu0 0.0
    %226 = vmatprep.subr.mxu0 0.0
    %227 = vmatpush1.msra.mxu0 0.0
    %228 = vmatprep.subr.mxu0 0.0
    %229 = vmatpush1.msra.mxu0 0.0
    %230 = vmatprep.subr.mxu0 0.0
    %231 = vmatpush1.msra.mxu0 0.0
    %232 = vmatprep.subr.mxu0 0.0
    %233 = vmatpush1.msra.mxu0 0.0
    %234 = vmatprep.subr.mxu0 0.0
    %235 = vmatpush1.msra.mxu0 0.0
    %236 = vmatprep.subr.mxu0 0.0
    %237 = vmatpush1.msra.mxu0 %v174
    %238 = vmatprep.subr.mxu0 0.0
    %239 = vmatpush2.msra.mxu0 0.0
    %240 = vmatprep.subr.mxu0 0.0
    %241 = vmatpush2.msra.mxu0 0.0
    %242 = vmatprep.subr.mxu0 0.0
    %243 = vmatpush2.msra.mxu0 0.0
    %244 = vmatprep.subr.mxu0 0.0
    %245 = vmatpush2.msra.mxu0 0.0
    %246 = vmatprep.subr.mxu0 0.0
    %247 = vmatpush2.msra.mxu0 0.0
    %248 = vmatprep.subr.mxu0 0.0
    %249 = vmatpush2.msra.mxu0 0.0
    %250 = vmatprep.subr.mxu0 0.0
    %251 = vmatpush2.msra.mxu0 0.0
    %252 = vmatprep.subr.mxu0 0.0
    %253 = vmatpush2.msra.mxu0 0.0
    %254 = vmatprep.subr.mxu0 0.0
    %255 = vmatpush2.msra.mxu0 0.0
    %256 = vmatprep.subr.mxu0 0.0
    %257 = vmatpush2.msra.mxu0 0.0
    %258 = vmatprep.subr.mxu0 0.0
    %259 = vmatpush2.msra.mxu0 0.0
    %260 = vmatprep.subr.mxu0 0.0
    %261 = vmatpush2.msra.mxu0 0.0
    %262 = vmatprep.subr.mxu0 0.0
    %263 = vmatpush2.msra.mxu0 0.0
    %264 = vmatprep.subr.mxu0 0.0
    %265 = vmatpush2.msra.mxu0 0.0
    %266 = vmatprep.subr.mxu0 0.0
    %267 = vmatpush2.msra.mxu0 0.0
    %268 = vmatprep.subr.mxu0 0.0
    %269 = vmatpush2.msra.mxu0 0.0
    %270 = vmatprep.mubr.f32.mxu0 0.0
    %271 = vmatmul.mubr.f32.gmra.mxu0 %v183
    %v272 = vpop.f32.mrf.mxu0
    %v273 = vadd.f32 %v179, %v272
    %v274 = vpop.f32.mrf.mxu0
    %275 = vmatprep.mubr.f32.mxu0 0.0
    %276 = vmatmul.mubr.f32.gmra.mxu0 %v186
    %v277 = vpop.f32.mrf.mxu0
    %v278 = vadd.f32 %v179, %v277
    %v279 = vpop.f32.mrf.mxu0
    %280 = vmatprep.mubr.f32.mxu0 0.0
    %281 = vmatmul.mubr.f32.gmra.mxu0 %v189
    %v282 = vpop.f32.mrf.mxu0
    %v283 = vadd.f32 %v179, %v282
    %v284 = vpop.f32.mrf.mxu0
    %285 = vmatprep.mubr.f32.mxu0 0.0
    %286 = vmatmul.mubr.f32.gmra.mxu0 %v192
    %v287 = vpop.f32.mrf.mxu0
    %v288 = vadd.f32 %v179, %v287
    %v289 = vpop.f32.mrf.mxu0
    %290 = vmatprep.mubr.f32.mxu0 0.0
    %291 = vmatmul.mubr.f32.gmra.mxu0 %v195
    %v292 = vpop.f32.mrf.mxu0
    %v293 = vadd.f32 %v179, %v292
    %v294 = vpop.f32.mrf.mxu0
    %295 = vmatprep.mubr.f32.mxu0 0.0
    %296 = vmatmul.mubr.f32.gmra.mxu0 %v198
    %v297 = vpop.f32.mrf.mxu0
    %v298 = vadd.f32 %v179, %v297
    %v299 = vpop.f32.mrf.mxu0
    %300 = vmatprep.mubr.f32.mxu0 0.0
    %301 = vmatmul.mubr.f32.gmra.mxu0 %v201
    %v302 = vpop.f32.mrf.mxu0
    %v303 = vadd.f32 %v179, %v302
    %v304 = vpop.f32.mrf.mxu0
    %305 = vmatprep.mubr.f32.mxu0 0.0
    %306 = vmatmul.mubr.f32.gmra.mxu0 %v204
    %v307 = vpop.f32.mrf.mxu0
    %v308 = vadd.f32 %v179, %v307
    %v309 = vpop.f32.mrf.mxu0
    %310 = vdwg.mxu0
    %vm311 = vcmask 261120
    %v313 = vsel %vm311, 0.0, 0
    %315 = vmatprep.subr.mxu0 0.0
    %316 = vmatpush1.msra.mxu0 0.0
    %317 = vmatprep.subr.mxu0 0.0
    %318 = vmatpush1.msra.mxu0 0.0
    %319 = vmatprep.subr.mxu0 0.0
    %320 = vmatpush1.msra.mxu0 0.0
    %321 = vmatprep.subr.mxu0 0.0
    %322 = vmatpush1.msra.mxu0 0.0
    %323 = vmatprep.subr.mxu0 0.0
    %324 = vmatpush1.msra.mxu0 0.0
    %325 = vmatprep.subr.mxu0 0.0
    %326 = vmatpush1.msra.mxu0 0.0
    %327 = vmatprep.subr.mxu0 0.0
    %328 = vmatpush1.msra.mxu0 0.0
    %329 = vmatprep.subr.mxu0 0.0
    %330 = vmatpush1.msra.mxu0 0.0
    %331 = vmatprep.subr.mxu0 0.0
    %332 = vmatpush1.msra.mxu0 0.0
    %333 = vmatprep.subr.mxu0 0.0
    %334 = vmatpush1.msra.mxu0 0.0
    %335 = vmatprep.subr.mxu0 0.0
    %336 = vmatpush1.msra.mxu0 0.0
    %337 = vmatprep.subr.mxu0 0.0
    %338 = vmatpush1.msra.mxu0 0.0
    %339 = vmatprep.subr.mxu0 0.0
    %340 = vmatpush1.msra.mxu0 %v38
    %341 = vmatprep.subr.mxu0 0.0
    %342 = vmatpush1.msra.mxu0 %v37
    %343 = vmatprep.subr.mxu0 0.0
    %344 = vmatpush1.msra.mxu0 %v36
    %345 = vmatprep.subr.mxu0 0.0
    %346 = vmatpush1.msra.mxu0 %v35
    %347 = vmatprep.subr.mxu0 0.0
    %348 = vmatpush2.msra.mxu0 0.0
    %349 = vmatprep.subr.mxu0 0.0
    %350 = vmatpush2.msra.mxu0 0.0
    %351 = vmatprep.subr.mxu0 0.0
    %352 = vmatpush2.msra.mxu0 0.0
    %353 = vmatprep.subr.mxu0 0.0
    %354 = vmatpush2.msra.mxu0 0.0
    %355 = vmatprep.subr.mxu0 0.0
    %356 = vmatpush2.msra.mxu0 0.0
    %357 = vmatprep.subr.mxu0 0.0
    %358 = vmatpush2.msra.mxu0 0.0
    %359 = vmatprep.subr.mxu0 0.0
    %360 = vmatpush2.msra.mxu0 0.0
    %361 = vmatprep.subr.mxu0 0.0
    %362 = vmatpush2.msra.mxu0 0.0
    %363 = vmatprep.subr.mxu0 0.0
    %364 = vmatpush2.msra.mxu0 0.0
    %365 = vmatprep.subr.mxu0 0.0
    %366 = vmatpush2.msra.mxu0 0.0
    %367 = vmatprep.subr.mxu0 0.0
    %368 = vmatpush2.msra.mxu0 0.0
    %369 = vmatprep.subr.mxu0 0.0
    %370 = vmatpush2.msra.mxu0 0.0
    %371 = vmatprep.subr.mxu0 0.0
    %372 = vmatpush2.msra.mxu0 0.0
    %373 = vmatprep.subr.mxu0 0.0
    %374 = vmatpush2.msra.mxu0 0.0
    %375 = vmatprep.subr.mxu0 0.0
    %376 = vmatpush2.msra.mxu0 0.0
    %377 = vmatprep.subr.mxu0 0.0
    %378 = vmatpush2.msra.mxu0 0.0
    %379 = vmatprep.mubr.f32.mxu0 0.0
    %380 = vmatmul.mubr.f32.gmra.mxu0 %v313
    %v381 = vpop.f32.mrf.mxu0
    %v382 = vadd.f32 0.0, %v381
    %v383 = vpop.f32.mrf.mxu0
    %384 = vdwg.mxu0
    %v385 = vadd.f32 %v273, %v382
    %v386 = vtanh.pop %v385
    %v387 = vmul.f32 %v386, 0.5
    %v388 = vadd.f32 %v387, 0.5
    %v389 = vmul.f32 %v388, 0.0
    %391 = vrot.lane.b32.xlu0 %v386, 64
    %v392 = vpop.permute.xlu0 %391
    %v394 = vmul.f32 %v388, %v392
    %396 = vrot.lane.b32.xlu0 %v394, 32
    %v397 = vpop.permute.xlu0 %396
    %v399 = vadd.f32 %v389, %v397
    %v400 = vtanh.pop %v399
    %402 = vrot.lane.b32.xlu0 %v400, 64
    %v403 = vpop.permute.xlu0 %402
    %v405 = vmul.f32 %v388, %v403
    %407 = vrot.lane.b32.xlu0 %v405, 32
    %v408 = vpop.permute.xlu0 %407
    %v409 = vsel %vm311, %v408, 0
    %411 = vmatprep.subr.mxu0 0.0
    %412 = vmatpush1.msra.mxu0 0.0
    %413 = vmatprep.subr.mxu0 0.0
    %414 = vmatpush1.msra.mxu0 0.0
    %415 = vmatprep.subr.mxu0 0.0
    %416 = vmatpush1.msra.mxu0 0.0
    %417 = vmatprep.subr.mxu0 0.0
    %418 = vmatpush1.msra.mxu0 0.0
    %419 = vmatprep.subr.mxu0 0.0
    %420 = vmatpush1.msra.mxu0 0.0
    %421 = vmatprep.subr.mxu0 0.0
    %422 = vmatpush1.msra.mxu0 0.0
    %423 = vmatprep.subr.mxu0 0.0
    %424 = vmatpush1.msra.mxu0 0.0
    %425 = vmatprep.subr.mxu0 0.0
    %426 = vmatpush1.msra.mxu0 0.0
    %427 = vmatprep.subr.mxu0 0.0
    %428 = vmatpush1.msra.mxu0 0.0
    %429 = vmatprep.subr.mxu0 0.0
    %430 = vmatpush1.msra.mxu0 0.0
    %431 = vmatprep.subr.mxu0 0.0
    %432 = vmatpush1.msra.mxu0 0.0
    %433 = vmatprep.subr.mxu0 0.0
    %434 = vmatpush1.msra.mxu0 0.0
    %435 = vmatprep.subr.mxu0 0.0
    %436 = vmatpush1.msra.mxu0 %v38
    %437 = vmatprep.subr.mxu0 0.0
    %438 = vmatpush1.msra.mxu0 %v37
    %439 = vmatprep.subr.mxu0 0.0
    %440 = vmatpush1.msra.mxu0 %v36
    %441 = vmatprep.subr.mxu0 0.0
    %442 = vmatpush1.msra.mxu0 %v35
    %443 = vmatprep.subr.mxu0 0.0
    %444 = vmatpush2.msra.mxu0 0.0
    %445 = vmatprep.subr.mxu0 0.0
    %446 = vmatpush2.msra.mxu0 0.0
    %447 = vmatprep.subr.mxu0 0.0
    %448 = vmatpush2.msra.mxu0 0.0
    %449 = vmatprep.subr.mxu0 0.0
    %450 = vmatpush2.msra.mxu0 0.0
    %451 = vmatprep.subr.mxu0 0.0
    %452 = vmatpush2.msra.mxu0 0.0
    %453 = vmatprep.subr.mxu0 0.0
    %454 = vmatpush2.msra.mxu0 0.0
    %455 = vmatprep.subr.mxu0 0.0
    %456 = vmatpush2.msra.mxu0 0.0
    %457 = vmatprep.subr.mxu0 0.0
    %458 = vmatpush2.msra.mxu0 0.0
    %459 = vmatprep.subr.mxu0 0.0
    %460 = vmatpush2.msra.mxu0 0.0
    %461 = vmatprep.subr.mxu0 0.0
    %462 = vmatpush2.msra.mxu0 0.0
    %463 = vmatprep.subr.mxu0 0.0
    %464 = vmatpush2.msra.mxu0 0.0
    %465 = vmatprep.subr.mxu0 0.0
    %466 = vmatpush2.msra.mxu0 0.0
    %467 = vmatprep.subr.mxu0 0.0
    %468 = vmatpush2.msra.mxu0 0.0
    %469 = vmatprep.subr.mxu0 0.0
    %470 = vmatpush2.msra.mxu0 0.0
    %471 = vmatprep.subr.mxu0 0.0
    %472 = vmatpush2.msra.mxu0 0.0
    %473 = vmatprep.subr.mxu0 0.0
    %474 = vmatpush2.msra.mxu0 0.0
    %475 = vmatprep.mubr.f32.mxu0 0.0
    %476 = vmatmul.mubr.f32.gmra.mxu0 %v409
    %v477 = vpop.f32.mrf.mxu0
    %v478 = vadd.f32 0.0, %v477
    %v479 = vpop.f32.mrf.mxu0
    %480 = vdwg.mxu0
    %v481 = vadd.f32 %v278, %v478
    %v482 = vtanh.pop %v481
    %v483 = vmul.f32 %v482, 0.5
    %v484 = vadd.f32 %v483, 0.5
    %v485 = vmul.f32 %v484, %v399
    %487 = vrot.lane.b32.xlu0 %v482, 64
    %v488 = vpop.permute.xlu0 %487
    %v490 = vmul.f32 %v484, %v488
    %492 = vrot.lane.b32.xlu0 %v490, 32
    %v493 = vpop.permute.xlu0 %492
    %v495 = vadd.f32 %v485, %v493
    %v496 = vtanh.pop %v495
    %498 = vrot.lane.b32.xlu0 %v496, 64
    %v499 = vpop.permute.xlu0 %498
    %v501 = vmul.f32 %v484, %v499
    %502 = vmatprep.subr.mxu0 0.0
    %503 = vmatpush1.msra.mxu0 0.0
    %504 = vmatprep.subr.mxu0 0.0
    %505 = vmatpush1.msra.mxu0 0.0
    %506 = vmatprep.subr.mxu0 0.0
    %507 = vmatpush1.msra.mxu0 0.0
    %508 = vmatprep.subr.mxu0 0.0
    %509 = vmatpush1.msra.mxu0 0.0
    %510 = vmatprep.subr.mxu0 0.0
    %511 = vmatpush1.msra.mxu0 0.0
    %512 = vmatprep.subr.mxu0 0.0
    %513 = vmatpush1.msra.mxu0 0.0
    %514 = vmatprep.subr.mxu0 0.0
    %515 = vmatpush1.msra.mxu0 0.0
    %516 = vmatprep.subr.mxu0 0.0
    %517 = vmatpush1.msra.mxu0 0.0
    %518 = vmatprep.subr.mxu0 0.0
    %519 = vmatpush1.msra.mxu0 0.0
    %520 = vmatprep.subr.mxu0 0.0
    %521 = vmatpush1.msra.mxu0 0.0
    %522 = vmatprep.subr.mxu0 0.0
    %523 = vmatpush1.msra.mxu0 0.0
    %524 = vmatprep.subr.mxu0 0.0
    %525 = vmatpush1.msra.mxu0 0.0
    %526 = vmatprep.subr.mxu0 0.0
    %527 = vmatpush1.msra.mxu0 %v43
    %528 = vmatprep.subr.mxu0 0.0
    %529 = vmatpush1.msra.mxu0 %v42
    %530 = vmatprep.subr.mxu0 0.0
    %531 = vmatpush1.msra.mxu0 %v41
    %532 = vmatprep.subr.mxu0 0.0
    %533 = vmatpush1.msra.mxu0 %v40
    %534 = vmatprep.subr.mxu0 0.0
    %535 = vmatpush2.msra.mxu0 0.0
    %536 = vmatprep.subr.mxu0 0.0
    %537 = vmatpush2.msra.mxu0 0.0
    %538 = vmatprep.subr.mxu0 0.0
    %539 = vmatpush2.msra.mxu0 0.0
    %540 = vmatprep.subr.mxu0 0.0
    %541 = vmatpush2.msra.mxu0 0.0
    %542 = vmatprep.subr.mxu0 0.0
    %543 = vmatpush2.msra.mxu0 0.0
    %544 = vmatprep.subr.mxu0 0.0
    %545 = vmatpush2.msra.mxu0 0.0
    %546 = vmatprep.subr.mxu0 0.0
    %547 = vmatpush2.msra.mxu0 0.0
    %548 = vmatprep.subr.mxu0 0.0
    %549 = vmatpush2.msra.mxu0 0.0
    %550 = vmatprep.subr.mxu0 0.0
    %551 = vmatpush2.msra.mxu0 0.0
    %552 = vmatprep.subr.mxu0 0.0
    %553 = vmatpush2.msra.mxu0 0.0
    %554 = vmatprep.subr.mxu0 0.0
    %555 = vmatpush2.msra.mxu0 0.0
    %556 = vmatprep.subr.mxu0 0.0
    %557 = vmatpush2.msra.mxu0 0.0
    %558 = vmatprep.subr.mxu0 0.0
    %559 = vmatpush2.msra.mxu0 0.0
    %560 = vmatprep.subr.mxu0 0.0
    %561 = vmatpush2.msra.mxu0 0.0
    %562 = vmatprep.subr.mxu0 0.0
    %563 = vmatpush2.msra.mxu0 0.0
    %564 = vmatprep.subr.mxu0 0.0
    %565 = vmatpush2.msra.mxu0 0.0
    %566 = vmatprep.mubr.f32.mxu0 0.0
    %567 = vmatmul.mubr.f32.gmra.mxu0 %v313
    %v568 = vpop.f32.mrf.mxu0
    %v569 = vadd.f32 0.0, %v568
    %v570 = vpop.f32.mrf.mxu0
    %571 = vdwg.mxu0
    %572 = vmatprep.subr.mxu0 0.0
    %573 = vmatpush1.msra.mxu0 0.0
    %574 = vmatprep.subr.mxu0 0.0
    %575 = vmatpush1.msra.mxu0 0.0
    %576 = vmatprep.subr.mxu0 0.0
    %577 = vmatpush1.msra.mxu0 0.0
    %578 = vmatprep.subr.mxu0 0.0
    %579 = vmatpush1.msra.mxu0 0.0
    %580 = vmatprep.subr.mxu0 0.0
    %581 = vmatpush1.msra.mxu0 0.0
    %582 = vmatprep.subr.mxu0 0.0
    %583 = vmatpush1.msra.mxu0 0.0
    %584 = vmatprep.subr.mxu0 0.0
    %585 = vmatpush1.msra.mxu0 0.0
    %586 = vmatprep.subr.mxu0 0.0
    %587 = vmatpush1.msra.mxu0 0.0
    %588 = vmatprep.subr.mxu0 0.0
    %589 = vmatpush1.msra.mxu0 0.0
    %590 = vmatprep.subr.mxu0 0.0
    %591 = vmatpush1.msra.mxu0 0.0
    %592 = vmatprep.subr.mxu0 0.0
    %593 = vmatpush1.msra.mxu0 0.0
    %594 = vmatprep.subr.mxu0 0.0
    %595 = vmatpush1.msra.mxu0 0.0
    %596 = vmatprep.subr.mxu0 0.0
    %597 = vmatpush1.msra.mxu0 %v48
    %598 = vmatprep.subr.mxu0 0.0
    %599 = vmatpush1.msra.mxu0 %v47
    %600 = vmatprep.subr.mxu0 0.0
    %601 = vmatpush1.msra.mxu0 %v46
    %602 = vmatprep.subr.mxu0 0.0
    %603 = vmatpush1.msra.mxu0 %v45
    %604 = vmatprep.subr.mxu0 0.0
    %605 = vmatpush2.msra.mxu0 0.0
    %606 = vmatprep.subr.mxu0 0.0
    %607 = vmatpush2.msra.mxu0 0.0
    %608 = vmatprep.subr.mxu0 0.0
    %609 = vmatpush2.msra.mxu0 0.0
    %610 = vmatprep.subr.mxu0 0.0
    %611 = vmatpush2.msra.mxu0 0.0
    %612 = vmatprep.subr.mxu0 0.0
    %613 = vmatpush2.msra.mxu0 0.0
    %614 = vmatprep.subr.mxu0 0.0
    %615 = vmatpush2.msra.mxu0 0.0
    %616 = vmatprep.subr.mxu0 0.0
    %617 = vmatpush2.msra.mxu0 0.0
    %618 = vmatprep.subr.mxu0 0.0
    %619 = vmatpush2.msra.mxu0 0.0
    %620 = vmatprep.subr.mxu0 0.0
    %621 = vmatpush2.msra.mxu0 0.0
    %622 = vmatprep.subr.mxu0 0.0
    %623 = vmatpush2.msra.mxu0 0.0
    %624 = vmatprep.subr.mxu0 0.0
    %625 = vmatpush2.msra.mxu0 0.0
    %626 = vmatprep.subr.mxu0 0.0
    %627 = vmatpush2.msra.mxu0 0.0
    %628 = vmatprep.subr.mxu0 0.0
    %629 = vmatpush2.msra.mxu0 0.0
    %630 = vmatprep.subr.mxu0 0.0
    %631 = vmatpush2.msra.mxu0 0.0
    %632 = vmatprep.subr.mxu0 0.0
    %633 = vmatpush2.msra.mxu0 0.0
    %634 = vmatprep.subr.mxu0 0.0
    %635 = vmatpush2.msra.mxu0 0.0
    %636 = vmatprep.mubr.f32.mxu0 0.0
    %637 = vmatmul.mubr.f32.gmra.mxu0 %v409
    %v638 = vpop.f32.mrf.mxu0
    %v639 = vadd.f32 %v569, %v638
    %v640 = vpop.f32.mrf.mxu0
    %641 = vdwg.mxu0
    %v643 = vlaneseq
    %v644 = vshrl.u32 %v643, 7
    %v645 = vsub.s32 0, %v644
    %v646 = vrot.slane %v51, %v645
    %v648 = vadd.f32 %v639, %v646
    %v649 = vtanh.pop %v648
    %v650 = vmul.f32 %v649, 0.5
    %v651 = vadd.f32 %v650, 0.5
    %v652 = vmul.f32 %v651, 0.0
    %654 = vrot.lane.b32.xlu0 %v649, 64
    %v655 = vpop.permute.xlu0 %654
    %v657 = vmul.f32 %v651, %v655
    %659 = vrot.lane.b32.xlu0 %v657, 32
    %v660 = vpop.permute.xlu0 %659
    %v662 = vadd.f32 %v652, %v660
    %v663 = vtanh.pop %v662
    %665 = vrot.lane.b32.xlu0 %v663, 64
    %v666 = vpop.permute.xlu0 %665
    %v668 = vmul.f32 %v651, %v666
    %670 = vrot.lane.b32.xlu0 %v501, 32
    %v671 = vpop.permute.xlu0 %670
    %v672 = vsel %vm311, %v671, 0
    %674 = vmatprep.subr.mxu0 0.0
    %675 = vmatpush1.msra.mxu0 0.0
    %676 = vmatprep.subr.mxu0 0.0
    %677 = vmatpush1.msra.mxu0 0.0
    %678 = vmatprep.subr.mxu0 0.0
    %679 = vmatpush1.msra.mxu0 0.0
    %680 = vmatprep.subr.mxu0 0.0
    %681 = vmatpush1.msra.mxu0 0.0
    %682 = vmatprep.subr.mxu0 0.0
    %683 = vmatpush1.msra.mxu0 0.0
    %684 = vmatprep.subr.mxu0 0.0
    %685 = vmatpush1.msra.mxu0 0.0
    %686 = vmatprep.subr.mxu0 0.0
    %687 = vmatpush1.msra.mxu0 0.0
    %688 = vmatprep.subr.mxu0 0.0
    %689 = vmatpush1.msra.mxu0 0.0
    %690 = vmatprep.subr.mxu0 0.0
    %691 = vmatpush1.msra.mxu0 0.0
    %692 = vmatprep.subr.mxu0 0.0
    %693 = vmatpush1.msra.mxu0 0.0
    %694 = vmatprep.subr.mxu0 0.0
    %695 = vmatpush1.msra.mxu0 0.0
    %696 = vmatprep.subr.mxu0 0.0
    %697 = vmatpush1.msra.mxu0 0.0
    %698 = vmatprep.subr.mxu0 0.0
    %699 = vmatpush1.msra.mxu0 %v38
    %700 = vmatprep.subr.mxu0 0.0
    %701 = vmatpush1.msra.mxu0 %v37
    %702 = vmatprep.subr.mxu0 0.0
    %703 = vmatpush1.msra.mxu0 %v36
    %704 = vmatprep.subr.mxu0 0.0
    %705 = vmatpush1.msra.mxu0 %v35
    %706 = vmatprep.subr.mxu0 0.0
    %707 = vmatpush2.msra.mxu0 0.0
    %708 = vmatprep.subr.mxu0 0.0
    %709 = vmatpush2.msra.mxu0 0.0
    %710 = vmatprep.subr.mxu0 0.0
    %711 = vmatpush2.msra.mxu0 0.0
    %712 = vmatprep.subr.mxu0 0.0
    %713 = vmatpush2.msra.mxu0 0.0
    %714 = vmatprep.subr.mxu0 0.0
    %715 = vmatpush2.msra.mxu0 0.0
    %716 = vmatprep.subr.mxu0 0.0
    %717 = vmatpush2.msra.mxu0 0.0
    %718 = vmatprep.subr.mxu0 0.0
    %719 = vmatpush2.msra.mxu0 0.0
    %720 = vmatprep.subr.mxu0 0.0
    %721 = vmatpush2.msra.mxu0 0.0
    %722 = vmatprep.subr.mxu0 0.0
    %723 = vmatpush2.msra.mxu0 0.0
    %724 = vmatprep.subr.mxu0 0.0
    %725 = vmatpush2.msra.mxu0 0.0
    %726 = vmatprep.subr.mxu0 0.0
    %727 = vmatpush2.msra.mxu0 0.0
    %728 = vmatprep.subr.mxu0 0.0
    %729 = vmatpush2.msra.mxu0 0.0
    %730 = vmatprep.subr.mxu0 0.0
    %731 = vmatpush2.msra.mxu0 0.0
    %732 = vmatprep.subr.mxu0 0.0
    %733 = vmatpush2.msra.mxu0 0.0
    %734 = vmatprep.subr.mxu0 0.0
    %735 = vmatpush2.msra.mxu0 0.0
    %736 = vmatprep.subr.mxu0 0.0
    %737 = vmatpush2.msra.mxu0 0.0
    %738 = vmatprep.mubr.f32.mxu0 0.0
    %739 = vmatmul.mubr.f32.gmra.mxu0 %v672
    %v740 = vpop.f32.mrf.mxu0
    %v741 = vadd.f32 0.0, %v740
    %v742 = vpop.f32.mrf.mxu0
    %743 = vdwg.mxu0
    %v744 = vadd.f32 %v283, %v741
    %v745 = vtanh.pop %v744
    %v746 = vmul.f32 %v745, 0.5
    %v747 = vadd.f32 %v746, 0.5
    %v748 = vmul.f32 %v747, %v495
    %750 = vrot.lane.b32.xlu0 %v745, 64
    %v751 = vpop.permute.xlu0 %750
    %v753 = vmul.f32 %v747, %v751
    %755 = vrot.lane.b32.xlu0 %v753, 32
    %v756 = vpop.permute.xlu0 %755
    %v758 = vadd.f32 %v748, %v756
    %v759 = vtanh.pop %v758
    %761 = vrot.lane.b32.xlu0 %v759, 64
    %v762 = vpop.permute.xlu0 %761
    %v764 = vmul.f32 %v747, %v762
    %766 = vrot.lane.b32.xlu0 %v668, 32
    %v767 = vpop.permute.xlu0 %766
    %v768 = vsel %vm311, %v767, 0
    %770 = vmatprep.subr.mxu0 0.0
    %771 = vmatpush1.msra.mxu0 0.0
    %772 = vmatprep.subr.mxu0 0.0
    %773 = vmatpush1.msra.mxu0 0.0
    %774 = vmatprep.subr.mxu0 0.0
    %775 = vmatpush1.msra.mxu0 0.0
    %776 = vmatprep.subr.mxu0 0.0
    %777 = vmatpush1.msra.mxu0 0.0
    %778 = vmatprep.subr.mxu0 0.0
    %779 = vmatpush1.msra.mxu0 0.0
    %780 = vmatprep.subr.mxu0 0.0
    %781 = vmatpush1.msra.mxu0 0.0
    %782 = vmatprep.subr.mxu0 0.0
    %783 = vmatpush1.msra.mxu0 0.0
    %784 = vmatprep.subr.mxu0 0.0
    %785 = vmatpush1.msra.mxu0 0.0
    %786 = vmatprep.subr.mxu0 0.0
    %787 = vmatpush1.msra.mxu0 0.0
    %788 = vmatprep.subr.mxu0 0.0
    %789 = vmatpush1.msra.mxu0 0.0
    %790 = vmatprep.subr.mxu0 0.0
    %791 = vmatpush1.msra.mxu0 0.0
    %792 = vmatprep.subr.mxu0 0.0
    %793 = vmatpush1.msra.mxu0 0.0
    %794 = vmatprep.subr.mxu0 0.0
    %795 = vmatpush1.msra.mxu0 %v43
    %796 = vmatprep.subr.mxu0 0.0
    %797 = vmatpush1.msra.mxu0 %v42
    %798 = vmatprep.subr.mxu0 0.0
    %799 = vmatpush1.msra.mxu0 %v41
    %800 = vmatprep.subr.mxu0 0.0
    %801 = vmatpush1.msra.mxu0 %v40
    %802 = vmatprep.subr.mxu0 0.0
    %803 = vmatpush2.msra.mxu0 0.0
    %804 = vmatprep.subr.mxu0 0.0
    %805 = vmatpush2.msra.mxu0 0.0
    %806 = vmatprep.subr.mxu0 0.0
    %807 = vmatpush2.msra.mxu0 0.0
    %808 = vmatprep.subr.mxu0 0.0
    %809 = vmatpush2.msra.mxu0 0.0
    %810 = vmatprep.subr.mxu0 0.0
    %811 = vmatpush2.msra.mxu0 0.0
    %812 = vmatprep.subr.mxu0 0.0
    %813 = vmatpush2.msra.mxu0 0.0
    %814 = vmatprep.subr.mxu0 0.0
    %815 = vmatpush2.msra.mxu0 0.0
    %816 = vmatprep.subr.mxu0 0.0
    %817 = vmatpush2.msra.mxu0 0.0
    %818 = vmatprep.subr.mxu0 0.0
    %819 = vmatpush2.msra.mxu0 0.0
    %820 = vmatprep.subr.mxu0 0.0
    %821 = vmatpush2.msra.mxu0 0.0
    %822 = vmatprep.subr.mxu0 0.0
    %823 = vmatpush2.msra.mxu0 0.0
    %824 = vmatprep.subr.mxu0 0.0
    %825 = vmatpush2.msra.mxu0 0.0
    %826 = vmatprep.subr.mxu0 0.0
    %827 = vmatpush2.msra.mxu0 0.0
    %828 = vmatprep.subr.mxu0 0.0
    %829 = vmatpush2.msra.mxu0 0.0
    %830 = vmatprep.subr.mxu0 0.0
    %831 = vmatpush2.msra.mxu0 0.0
    %832 = vmatprep.subr.mxu0 0.0
    %833 = vmatpush2.msra.mxu0 0.0
    %834 = vmatprep.mubr.f32.mxu0 0.0
    %835 = vmatmul.mubr.f32.gmra.mxu0 %v768
    %v836 = vpop.f32.mrf.mxu0
    %v837 = vadd.f32 0.0, %v836
    %v838 = vpop.f32.mrf.mxu0
    %839 = vdwg.mxu0
    %840 = vmatprep.subr.mxu0 0.0
    %841 = vmatpush1.msra.mxu0 0.0
    %842 = vmatprep.subr.mxu0 0.0
    %843 = vmatpush1.msra.mxu0 0.0
    %844 = vmatprep.subr.mxu0 0.0
    %845 = vmatpush1.msra.mxu0 0.0
    %846 = vmatprep.subr.mxu0 0.0
    %847 = vmatpush1.msra.mxu0 0.0
    %848 = vmatprep.subr.mxu0 0.0
    %849 = vmatpush1.msra.mxu0 0.0
    %850 = vmatprep.subr.mxu0 0.0
    %851 = vmatpush1.msra.mxu0 0.0
    %852 = vmatprep.subr.mxu0 0.0
    %853 = vmatpush1.msra.mxu0 0.0
    %854 = vmatprep.subr.mxu0 0.0
    %855 = vmatpush1.msra.mxu0 0.0
    %856 = vmatprep.subr.mxu0 0.0
    %857 = vmatpush1.msra.mxu0 0.0
    %858 = vmatprep.subr.mxu0 0.0
    %859 = vmatpush1.msra.mxu0 0.0
    %860 = vmatprep.subr.mxu0 0.0
    %861 = vmatpush1.msra.mxu0 0.0
    %862 = vmatprep.subr.mxu0 0.0
    %863 = vmatpush1.msra.mxu0 0.0
    %864 = vmatprep.subr.mxu0 0.0
    %865 = vmatpush1.msra.mxu0 %v48
    %866 = vmatprep.subr.mxu0 0.0
    %867 = vmatpush1.msra.mxu0 %v47
    %868 = vmatprep.subr.mxu0 0.0
    %869 = vmatpush1.msra.mxu0 %v46
    %870 = vmatprep.subr.mxu0 0.0
    %871 = vmatpush1.msra.mxu0 %v45
    %872 = vmatprep.subr.mxu0 0.0
    %873 = vmatpush2.msra.mxu0 0.0
    %874 = vmatprep.subr.mxu0 0.0
    %875 = vmatpush2.msra.mxu0 0.0
    %876 = vmatprep.subr.mxu0 0.0
    %877 = vmatpush2.msra.mxu0 0.0
    %878 = vmatprep.subr.mxu0 0.0
    %879 = vmatpush2.msra.mxu0 0.0
    %880 = vmatprep.subr.mxu0 0.0
    %881 = vmatpush2.msra.mxu0 0.0
    %882 = vmatprep.subr.mxu0 0.0
    %883 = vmatpush2.msra.mxu0 0.0
    %884 = vmatprep.subr.mxu0 0.0
    %885 = vmatpush2.msra.mxu0 0.0
    %886 = vmatprep.subr.mxu0 0.0
    %887 = vmatpush2.msra.mxu0 0.0
    %888 = vmatprep.subr.mxu0 0.0
    %889 = vmatpush2.msra.mxu0 0.0
    %890 = vmatprep.subr.mxu0 0.0
    %891 = vmatpush2.msra.mxu0 0.0
    %892 = vmatprep.subr.mxu0 0.0
    %893 = vmatpush2.msra.mxu0 0.0
    %894 = vmatprep.subr.mxu0 0.0
    %895 = vmatpush2.msra.mxu0 0.0
    %896 = vmatprep.subr.mxu0 0.0
    %897 = vmatpush2.msra.mxu0 0.0
    %898 = vmatprep.subr.mxu0 0.0
    %899 = vmatpush2.msra.mxu0 0.0
    %900 = vmatprep.subr.mxu0 0.0
    %901 = vmatpush2.msra.mxu0 0.0
    %902 = vmatprep.subr.mxu0 0.0
    %903 = vmatpush2.msra.mxu0 0.0
    %904 = vmatprep.mubr.f32.mxu0 0.0
    %905 = vmatmul.mubr.f32.gmra.mxu0 %v672
    %v906 = vpop.f32.mrf.mxu0
    %v907 = vadd.f32 %v837, %v906
    %v908 = vpop.f32.mrf.mxu0
    %909 = vdwg.mxu0
    %v910 = vadd.f32 %v907, %v646
    %v911 = vtanh.pop %v910
    %v912 = vmul.f32 %v911, 0.5
    %v913 = vadd.f32 %v912, 0.5
    %v914 = vmul.f32 %v913, %v662
    %916 = vrot.lane.b32.xlu0 %v911, 64
    %v917 = vpop.permute.xlu0 %916
    %v919 = vmul.f32 %v913, %v917
    %921 = vrot.lane.b32.xlu0 %v919, 32
    %v922 = vpop.permute.xlu0 %921
    %v924 = vadd.f32 %v914, %v922
    %v925 = vtanh.pop %v924
    %927 = vrot.lane.b32.xlu0 %v925, 64
    %v928 = vpop.permute.xlu0 %927
    %v930 = vmul.f32 %v913, %v928
    %932 = vrot.lane.b32.xlu0 %v764, 32
    %v933 = vpop.permute.xlu0 %932
    %v934 = vsel %vm311, %v933, 0
    %936 = vmatprep.subr.mxu0 0.0
    %937 = vmatpush1.msra.mxu0 0.0
    %938 = vmatprep.subr.mxu0 0.0
    %939 = vmatpush1.msra.mxu0 0.0
    %940 = vmatprep.subr.mxu0 0.0
    %941 = vmatpush1.msra.mxu0 0.0
    %942 = vmatprep.subr.mxu0 0.0
    %943 = vmatpush1.msra.mxu0 0.0
    %944 = vmatprep.subr.mxu0 0.0
    %945 = vmatpush1.msra.mxu0 0.0
    %946 = vmatprep.subr.mxu0 0.0
    %947 = vmatpush1.msra.mxu0 0.0
    %948 = vmatprep.subr.mxu0 0.0
    %949 = vmatpush1.msra.mxu0 0.0
    %950 = vmatprep.subr.mxu0 0.0
    %951 = vmatpush1.msra.mxu0 0.0
    %952 = vmatprep.subr.mxu0 0.0
    %953 = vmatpush1.msra.mxu0 0.0
    %954 = vmatprep.subr.mxu0 0.0
    %955 = vmatpush1.msra.mxu0 0.0
    %956 = vmatprep.subr.mxu0 0.0
    %957 = vmatpush1.msra.mxu0 0.0
    %958 = vmatprep.subr.mxu0 0.0
    %959 = vmatpush1.msra.mxu0 0.0
    %960 = vmatprep.subr.mxu0 0.0
    %961 = vmatpush1.msra.mxu0 %v38
    %962 = vmatprep.subr.mxu0 0.0
    %963 = vmatpush1.msra.mxu0 %v37
    %964 = vmatprep.subr.mxu0 0.0
    %965 = vmatpush1.msra.mxu0 %v36
    %966 = vmatprep.subr.mxu0 0.0
    %967 = vmatpush1.msra.mxu0 %v35
    %968 = vmatprep.subr.mxu0 0.0
    %969 = vmatpush2.msra.mxu0 0.0
    %970 = vmatprep.subr.mxu0 0.0
    %971 = vmatpush2.msra.mxu0 0.0
    %972 = vmatprep.subr.mxu0 0.0
    %973 = vmatpush2.msra.mxu0 0.0
    %974 = vmatprep.subr.mxu0 0.0
    %975 = vmatpush2.msra.mxu0 0.0
    %976 = vmatprep.subr.mxu0 0.0
    %977 = vmatpush2.msra.mxu0 0.0
    %978 = vmatprep.subr.mxu0 0.0
    %979 = vmatpush2.msra.mxu0 0.0
    %980 = vmatprep.subr.mxu0 0.0
    %981 = vmatpush2.msra.mxu0 0.0
    %982 = vmatprep.subr.mxu0 0.0
    %983 = vmatpush2.msra.mxu0 0.0
    %984 = vmatprep.subr.mxu0 0.0
    %985 = vmatpush2.msra.mxu0 0.0
    %986 = vmatprep.subr.mxu0 0.0
    %987 = vmatpush2.msra.mxu0 0.0
    %988 = vmatprep.subr.mxu0 0.0
    %989 = vmatpush2.msra.mxu0 0.0
    %990 = vmatprep.subr.mxu0 0.0
    %991 = vmatpush2.msra.mxu0 0.0
    %992 = vmatprep.subr.mxu0 0.0
    %993 = vmatpush2.msra.mxu0 0.0
    %994 = vmatprep.subr.mxu0 0.0
    %995 = vmatpush2.msra.mxu0 0.0
    %996 = vmatprep.subr.mxu0 0.0
    %997 = vmatpush2.msra.mxu0 0.0
    %998 = vmatprep.subr.mxu0 0.0
    %999 = vmatpush2.msra.mxu0 0.0
    %1000 = vmatprep.mubr.f32.mxu0 0.0
    %1001 = vmatmul.mubr.f32.gmra.mxu0 %v934
    %v1002 = vpop.f32.mrf.mxu0
    %v1003 = vadd.f32 0.0, %v1002
    %v1004 = vpop.f32.mrf.mxu0
    %1005 = vdwg.mxu0
    %v1006 = vadd.f32 %v288, %v1003
    %v1007 = vtanh.pop %v1006
    %v1008 = vmul.f32 %v1007, 0.5
    %v1009 = vadd.f32 %v1008, 0.5
    %v1010 = vmul.f32 %v1009, %v758
    %1012 = vrot.lane.b32.xlu0 %v1007, 64
    %v1013 = vpop.permute.xlu0 %1012
    %v1015 = vmul.f32 %v1009, %v1013
    %1017 = vrot.lane.b32.xlu0 %v1015, 32
    %v1018 = vpop.permute.xlu0 %1017
    %v1020 = vadd.f32 %v1010, %v1018
    %v1021 = vtanh.pop %v1020
    %1023 = vrot.lane.b32.xlu0 %v1021, 64
    %v1024 = vpop.permute.xlu0 %1023
    %v1026 = vmul.f32 %v1009, %v1024
    %1028 = vrot.lane.b32.xlu0 %v930, 32
    %v1029 = vpop.permute.xlu0 %1028
    %v1030 = vsel %vm311, %v1029, 0
    %1032 = vmatprep.subr.mxu0 0.0
    %1033 = vmatpush1.msra.mxu0 0.0
    %1034 = vmatprep.subr.mxu0 0.0
    %1035 = vmatpush1.msra.mxu0 0.0
    %1036 = vmatprep.subr.mxu0 0.0
    %1037 = vmatpush1.msra.mxu0 0.0
    %1038 = vmatprep.subr.mxu0 0.0
    %1039 = vmatpush1.msra.mxu0 0.0
    %1040 = vmatprep.subr.mxu0 0.0
    %1041 = vmatpush1.msra.mxu0 0.0
    %1042 = vmatprep.subr.mxu0 0.0
    %1043 = vmatpush1.msra.mxu0 0.0
    %1044 = vmatprep.subr.mxu0 0.0
    %1045 = vmatpush1.msra.mxu0 0.0
    %1046 = vmatprep.subr.mxu0 0.0
    %1047 = vmatpush1.msra.mxu0 0.0
    %1048 = vmatprep.subr.mxu0 0.0
    %1049 = vmatpush1.msra.mxu0 0.0
    %1050 = vmatprep.subr.mxu0 0.0
    %1051 = vmatpush1.msra.mxu0 0.0
    %1052 = vmatprep.subr.mxu0 0.0
    %1053 = vmatpush1.msra.mxu0 0.0
    %1054 = vmatprep.subr.mxu0 0.0
    %1055 = vmatpush1.msra.mxu0 0.0
    %1056 = vmatprep.subr.mxu0 0.0
    %1057 = vmatpush1.msra.mxu0 %v43
    %1058 = vmatprep.subr.mxu0 0.0
    %1059 = vmatpush1.msra.mxu0 %v42
    %1060 = vmatprep.subr.mxu0 0.0
    %1061 = vmatpush1.msra.mxu0 %v41
    %1062 = vmatprep.subr.mxu0 0.0
    %1063 = vmatpush1.msra.mxu0 %v40
    %1064 = vmatprep.subr.mxu0 0.0
    %1065 = vmatpush2.msra.mxu0 0.0
    %1066 = vmatprep.subr.mxu0 0.0
    %1067 = vmatpush2.msra.mxu0 0.0
    %1068 = vmatprep.subr.mxu0 0.0
    %1069 = vmatpush2.msra.mxu0 0.0
    %1070 = vmatprep.subr.mxu0 0.0
    %1071 = vmatpush2.msra.mxu0 0.0
    %1072 = vmatprep.subr.mxu0 0.0
    %1073 = vmatpush2.msra.mxu0 0.0
    %1074 = vmatprep.subr.mxu0 0.0
    %1075 = vmatpush2.msra.mxu0 0.0
    %1076 = vmatprep.subr.mxu0 0.0
    %1077 = vmatpush2.msra.mxu0 0.0
    %1078 = vmatprep.subr.mxu0 0.0
    %1079 = vmatpush2.msra.mxu0 0.0
    %1080 = vmatprep.subr.mxu0 0.0
    %1081 = vmatpush2.msra.mxu0 0.0
    %1082 = vmatprep.subr.mxu0 0.0
    %1083 = vmatpush2.msra.mxu0 0.0
    %1084 = vmatprep.subr.mxu0 0.0
    %1085 = vmatpush2.msra.mxu0 0.0
    %1086 = vmatprep.subr.mxu0 0.0
    %1087 = vmatpush2.msra.mxu0 0.0
    %1088 = vmatprep.subr.mxu0 0.0
    %1089 = vmatpush2.msra.mxu0 0.0
    %1090 = vmatprep.subr.mxu0 0.0
    %1091 = vmatpush2.msra.mxu0 0.0
    %1092 = vmatprep.subr.mxu0 0.0
    %1093 = vmatpush2.msra.mxu0 0.0
    %1094 = vmatprep.subr.mxu0 0.0
    %1095 = vmatpush2.msra.mxu0 0.0
    %1096 = vmatprep.mubr.f32.mxu0 0.0
    %1097 = vmatmul.mubr.f32.gmra.mxu0 %v1030
    %v1098 = vpop.f32.mrf.mxu0
    %v1099 = vadd.f32 0.0, %v1098
    %v1100 = vpop.f32.mrf.mxu0
    %1101 = vdwg.mxu0
    %1102 = vmatprep.subr.mxu0 0.0
    %1103 = vmatpush1.msra.mxu0 0.0
    %1104 = vmatprep.subr.mxu0 0.0
    %1105 = vmatpush1.msra.mxu0 0.0
    %1106 = vmatprep.subr.mxu0 0.0
    %1107 = vmatpush1.msra.mxu0 0.0
    %1108 = vmatprep.subr.mxu0 0.0
    %1109 = vmatpush1.msra.mxu0 0.0
    %1110 = vmatprep.subr.mxu0 0.0
    %1111 = vmatpush1.msra.mxu0 0.0
    %1112 = vmatprep.subr.mxu0 0.0
    %1113 = vmatpush1.msra.mxu0 0.0
    %1114 = vmatprep.subr.mxu0 0.0
    %1115 = vmatpush1.msra.mxu0 0.0
    %1116 = vmatprep.subr.mxu0 0.0
    %1117 = vmatpush1.msra.mxu0 0.0
    %1118 = vmatprep.subr.mxu0 0.0
    %1119 = vmatpush1.msra.mxu0 0.0
    %1120 = vmatprep.subr.mxu0 0.0
    %1121 = vmatpush1.msra.mxu0 0.0
    %1122 = vmatprep.subr.mxu0 0.0
    %1123 = vmatpush1.msra.mxu0 0.0
    %1124 = vmatprep.subr.mxu0 0.0
    %1125 = vmatpush1.msra.mxu0 0.0
    %1126 = vmatprep.subr.mxu0 0.0
    %1127 = vmatpush1.msra.mxu0 %v48
    %1128 = vmatprep.subr.mxu0 0.0
    %1129 = vmatpush1.msra.mxu0 %v47
    %1130 = vmatprep.subr.mxu0 0.0
    %1131 = vmatpush1.msra.mxu0 %v46
    %1132 = vmatprep.subr.mxu0 0.0
    %1133 = vmatpush1.msra.mxu0 %v45
    %1134 = vmatprep.subr.mxu0 0.0
    %1135 = vmatpush2.msra.mxu0 0.0
    %1136 = vmatprep.subr.mxu0 0.0
    %1137 = vmatpush2.msra.mxu0 0.0
    %1138 = vmatprep.subr.mxu0 0.0
    %1139 = vmatpush2.msra.mxu0 0.0
    %1140 = vmatprep.subr.mxu0 0.0
    %1141 = vmatpush2.msra.mxu0 0.0
    %1142 = vmatprep.subr.mxu0 0.0
    %1143 = vmatpush2.msra.mxu0 0.0
    %1144 = vmatprep.subr.mxu0 0.0
    %1145 = vmatpush2.msra.mxu0 0.0
    %1146 = vmatprep.subr.mxu0 0.0
    %1147 = vmatpush2.msra.mxu0 0.0
    %1148 = vmatprep.subr.mxu0 0.0
    %1149 = vmatpush2.msra.mxu0 0.0
    %1150 = vmatprep.subr.mxu0 0.0
    %1151 = vmatpush2.msra.mxu0 0.0
    %1152 = vmatprep.subr.mxu0 0.0
    %1153 = vmatpush2.msra.mxu0 0.0
    %1154 = vmatprep.subr.mxu0 0.0
    %1155 = vmatpush2.msra.mxu0 0.0
    %1156 = vmatprep.subr.mxu0 0.0
    %1157 = vmatpush2.msra.mxu0 0.0
    %1158 = vmatprep.subr.mxu0 0.0
    %1159 = vmatpush2.msra.mxu0 0.0
    %1160 = vmatprep.subr.mxu0 0.0
    %1161 = vmatpush2.msra.mxu0 0.0
    %1162 = vmatprep.subr.mxu0 0.0
    %1163 = vmatpush2.msra.mxu0 0.0
    %1164 = vmatprep.subr.mxu0 0.0
    %1165 = vmatpush2.msra.mxu0 0.0
    %1166 = vmatprep.mubr.f32.mxu0 0.0
    %1167 = vmatmul.mubr.f32.gmra.mxu0 %v934
    %v1168 = vpop.f32.mrf.mxu0
    %v1169 = vadd.f32 %v1099, %v1168
    %v1170 = vpop.f32.mrf.mxu0
    %1171 = vdwg.mxu0
    %v1172 = vadd.f32 %v1169, %v646
    %v1173 = vtanh.pop %v1172
    %v1174 = vmul.f32 %v1173, 0.5
    %v1175 = vadd.f32 %v1174, 0.5
    %v1176 = vmul.f32 %v1175, %v924
    %1178 = vrot.lane.b32.xlu0 %v1173, 64
    %v1179 = vpop.permute.xlu0 %1178
    %v1181 = vmul.f32 %v1175, %v1179
    %1183 = vrot.lane.b32.xlu0 %v1181, 32
    %v1184 = vpop.permute.xlu0 %1183
    %v1186 = vadd.f32 %v1176, %v1184
    %v1187 = vtanh.pop %v1186
    %1189 = vrot.lane.b32.xlu0 %v1187, 64
    %v1190 = vpop.permute.xlu0 %1189
    %v1192 = vmul.f32 %v1175, %v1190
    %1194 = vrot.lane.b32.xlu0 %v1026, 32
    %v1195 = vpop.permute.xlu0 %1194
    %v1196 = vsel %vm311, %v1195, 0
    %1198 = vmatprep.subr.mxu0 0.0
    %1199 = vmatpush1.msra.mxu0 0.0
    %1200 = vmatprep.subr.mxu0 0.0
    %1201 = vmatpush1.msra.mxu0 0.0
    %1202 = vmatprep.subr.mxu0 0.0
    %1203 = vmatpush1.msra.mxu0 0.0
    %1204 = vmatprep.subr.mxu0 0.0
    %1205 = vmatpush1.msra.mxu0 0.0
    %1206 = vmatprep.subr.mxu0 0.0
    %1207 = vmatpush1.msra.mxu0 0.0
    %1208 = vmatprep.subr.mxu0 0.0
    %1209 = vmatpush1.msra.mxu0 0.0
    %1210 = vmatprep.subr.mxu0 0.0
    %1211 = vmatpush1.msra.mxu0 0.0
    %1212 = vmatprep.subr.mxu0 0.0
    %1213 = vmatpush1.msra.mxu0 0.0
    %1214 = vmatprep.subr.mxu0 0.0
    %1215 = vmatpush1.msra.mxu0 0.0
    %1216 = vmatprep.subr.mxu0 0.0
    %1217 = vmatpush1.msra.mxu0 0.0
    %1218 = vmatprep.subr.mxu0 0.0
    %1219 = vmatpush1.msra.mxu0 0.0
    %1220 = vmatprep.subr.mxu0 0.0
    %1221 = vmatpush1.msra.mxu0 0.0
    %1222 = vmatprep.subr.mxu0 0.0
    %1223 = vmatpush1.msra.mxu0 %v38
    %1224 = vmatprep.subr.mxu0 0.0
    %1225 = vmatpush1.msra.mxu0 %v37
    %1226 = vmatprep.subr.mxu0 0.0
    %1227 = vmatpush1.msra.mxu0 %v36
    %1228 = vmatprep.subr.mxu0 0.0
    %1229 = vmatpush1.msra.mxu0 %v35
    %1230 = vmatprep.subr.mxu0 0.0
    %1231 = vmatpush2.msra.mxu0 0.0
    %1232 = vmatprep.subr.mxu0 0.0
    %1233 = vmatpush2.msra.mxu0 0.0
    %1234 = vmatprep.subr.mxu0 0.0
    %1235 = vmatpush2.msra.mxu0 0.0
    %1236 = vmatprep.subr.mxu0 0.0
    %1237 = vmatpush2.msra.mxu0 0.0
    %1238 = vmatprep.subr.mxu0 0.0
    %1239 = vmatpush2.msra.mxu0 0.0
    %1240 = vmatprep.subr.mxu0 0.0
    %1241 = vmatpush2.msra.mxu0 0.0
    %1242 = vmatprep.subr.mxu0 0.0
    %1243 = vmatpush2.msra.mxu0 0.0
    %1244 = vmatprep.subr.mxu0 0.0
    %1245 = vmatpush2.msra.mxu0 0.0
    %1246 = vmatprep.subr.mxu0 0.0
    %1247 = vmatpush2.msra.mxu0 0.0
    %1248 = vmatprep.subr.mxu0 0.0
    %1249 = vmatpush2.msra.mxu0 0.0
    %1250 = vmatprep.subr.mxu0 0.0
    %1251 = vmatpush2.msra.mxu0 0.0
    %1252 = vmatprep.subr.mxu0 0.0
    %1253 = vmatpush2.msra.mxu0 0.0
    %1254 = vmatprep.subr.mxu0 0.0
    %1255 = vmatpush2.msra.mxu0 0.0
    %1256 = vmatprep.subr.mxu0 0.0
    %1257 = vmatpush2.msra.mxu0 0.0
    %1258 = vmatprep.subr.mxu0 0.0
    %1259 = vmatpush2.msra.mxu0 0.0
    %1260 = vmatprep.subr.mxu0 0.0
    %1261 = vmatpush2.msra.mxu0 0.0
    %1262 = vmatprep.mubr.f32.mxu0 0.0
    %1263 = vmatmul.mubr.f32.gmra.mxu0 %v1196
    %v1264 = vpop.f32.mrf.mxu0
    %v1265 = vadd.f32 0.0, %v1264
    %v1266 = vpop.f32.mrf.mxu0
    %1267 = vdwg.mxu0
    %v1268 = vadd.f32 %v293, %v1265
    %v1269 = vtanh.pop %v1268
    %v1270 = vmul.f32 %v1269, 0.5
    %v1271 = vadd.f32 %v1270, 0.5
    %v1272 = vmul.f32 %v1271, %v1020
    %1274 = vrot.lane.b32.xlu0 %v1269, 64
    %v1275 = vpop.permute.xlu0 %1274
    %v1277 = vmul.f32 %v1271, %v1275
    %1279 = vrot.lane.b32.xlu0 %v1277, 32
    %v1280 = vpop.permute.xlu0 %1279
    %v1282 = vadd.f32 %v1272, %v1280
    %v1283 = vtanh.pop %v1282
    %1285 = vrot.lane.b32.xlu0 %v1283, 64
    %v1286 = vpop.permute.xlu0 %1285
    %v1288 = vmul.f32 %v1271, %v1286
    %1290 = vrot.lane.b32.xlu0 %v1192, 32
    %v1291 = vpop.permute.xlu0 %1290
    %v1292 = vsel %vm311, %v1291, 0
    %1294 = vmatprep.subr.mxu0 0.0
    %1295 = vmatpush1.msra.mxu0 0.0
    %1296 = vmatprep.subr.mxu0 0.0
    %1297 = vmatpush1.msra.mxu0 0.0
    %1298 = vmatprep.subr.mxu0 0.0
    %1299 = vmatpush1.msra.mxu0 0.0
    %1300 = vmatprep.subr.mxu0 0.0
    %1301 = vmatpush1.msra.mxu0 0.0
    %1302 = vmatprep.subr.mxu0 0.0
    %1303 = vmatpush1.msra.mxu0 0.0
    %1304 = vmatprep.subr.mxu0 0.0
    %1305 = vmatpush1.msra.mxu0 0.0
    %1306 = vmatprep.subr.mxu0 0.0
    %1307 = vmatpush1.msra.mxu0 0.0
    %1308 = vmatprep.subr.mxu0 0.0
    %1309 = vmatpush1.msra.mxu0 0.0
    %1310 = vmatprep.subr.mxu0 0.0
    %1311 = vmatpush1.msra.mxu0 0.0
    %1312 = vmatprep.subr.mxu0 0.0
    %1313 = vmatpush1.msra.mxu0 0.0
    %1314 = vmatprep.subr.mxu0 0.0
    %1315 = vmatpush1.msra.mxu0 0.0
    %1316 = vmatprep.subr.mxu0 0.0
    %1317 = vmatpush1.msra.mxu0 0.0
    %1318 = vmatprep.subr.mxu0 0.0
    %1319 = vmatpush1.msra.mxu0 %v43
    %1320 = vmatprep.subr.mxu0 0.0
    %1321 = vmatpush1.msra.mxu0 %v42
    %1322 = vmatprep.subr.mxu0 0.0
    %1323 = vmatpush1.msra.mxu0 %v41
    %1324 = vmatprep.subr.mxu0 0.0
    %1325 = vmatpush1.msra.mxu0 %v40
    %1326 = vmatprep.subr.mxu0 0.0
    %1327 = vmatpush2.msra.mxu0 0.0
    %1328 = vmatprep.subr.mxu0 0.0
    %1329 = vmatpush2.msra.mxu0 0.0
    %1330 = vmatprep.subr.mxu0 0.0
    %1331 = vmatpush2.msra.mxu0 0.0
    %1332 = vmatprep.subr.mxu0 0.0
    %1333 = vmatpush2.msra.mxu0 0.0
    %1334 = vmatprep.subr.mxu0 0.0
    %1335 = vmatpush2.msra.mxu0 0.0
    %1336 = vmatprep.subr.mxu0 0.0
    %1337 = vmatpush2.msra.mxu0 0.0
    %1338 = vmatprep.subr.mxu0 0.0
    %1339 = vmatpush2.msra.mxu0 0.0
    %1340 = vmatprep.subr.mxu0 0.0
    %1341 = vmatpush2.msra.mxu0 0.0
    %1342 = vmatprep.subr.mxu0 0.0
    %1343 = vmatpush2.msra.mxu0 0.0
    %1344 = vmatprep.subr.mxu0 0.0
    %1345 = vmatpush2.msra.mxu0 0.0
    %1346 = vmatprep.subr.mxu0 0.0
    %1347 = vmatpush2.msra.mxu0 0.0
    %1348 = vmatprep.subr.mxu0 0.0
    %1349 = vmatpush2.msra.mxu0 0.0
    %1350 = vmatprep.subr.mxu0 0.0
    %1351 = vmatpush2.msra.mxu0 0.0
    %1352 = vmatprep.subr.mxu0 0.0
    %1353 = vmatpush2.msra.mxu0 0.0
    %1354 = vmatprep.subr.mxu0 0.0
    %1355 = vmatpush2.msra.mxu0 0.0
    %1356 = vmatprep.subr.mxu0 0.0
    %1357 = vmatpush2.msra.mxu0 0.0
    %1358 = vmatprep.mubr.f32.mxu0 0.0
    %1359 = vmatmul.mubr.f32.gmra.mxu0 %v1292
    %v1360 = vpop.f32.mrf.mxu0
    %v1361 = vadd.f32 0.0, %v1360
    %v1362 = vpop.f32.mrf.mxu0
    %1363 = vdwg.mxu0
    %1364 = vmatprep.subr.mxu0 0.0
    %1365 = vmatpush1.msra.mxu0 0.0
    %1366 = vmatprep.subr.mxu0 0.0
    %1367 = vmatpush1.msra.mxu0 0.0
    %1368 = vmatprep.subr.mxu0 0.0
    %1369 = vmatpush1.msra.mxu0 0.0
    %1370 = vmatprep.subr.mxu0 0.0
    %1371 = vmatpush1.msra.mxu0 0.0
    %1372 = vmatprep.subr.mxu0 0.0
    %1373 = vmatpush1.msra.mxu0 0.0
    %1374 = vmatprep.subr.mxu0 0.0
    %1375 = vmatpush1.msra.mxu0 0.0
    %1376 = vmatprep.subr.mxu0 0.0
    %1377 = vmatpush1.msra.mxu0 0.0
    %1378 = vmatprep.subr.mxu0 0.0
    %1379 = vmatpush1.msra.mxu0 0.0
    %1380 = vmatprep.subr.mxu0 0.0
    %1381 = vmatpush1.msra.mxu0 0.0
    %1382 = vmatprep.subr.mxu0 0.0
    %1383 = vmatpush1.msra.mxu0 0.0
    %1384 = vmatprep.subr.mxu0 0.0
    %1385 = vmatpush1.msra.mxu0 0.0
    %1386 = vmatprep.subr.mxu0 0.0
    %1387 = vmatpush1.msra.mxu0 0.0
    %1388 = vmatprep.subr.mxu0 0.0
    %1389 = vmatpush1.msra.mxu0 %v48
    %1390 = vmatprep.subr.mxu0 0.0
    %1391 = vmatpush1.msra.mxu0 %v47
    %1392 = vmatprep.subr.mxu0 0.0
    %1393 = vmatpush1.msra.mxu0 %v46
    %1394 = vmatprep.subr.mxu0 0.0
    %1395 = vmatpush1.msra.mxu0 %v45
    %1396 = vmatprep.subr.mxu0 0.0
    %1397 = vmatpush2.msra.mxu0 0.0
    %1398 = vmatprep.subr.mxu0 0.0
    %1399 = vmatpush2.msra.mxu0 0.0
    %1400 = vmatprep.subr.mxu0 0.0
    %1401 = vmatpush2.msra.mxu0 0.0
    %1402 = vmatprep.subr.mxu0 0.0
    %1403 = vmatpush2.msra.mxu0 0.0
    %1404 = vmatprep.subr.mxu0 0.0
    %1405 = vmatpush2.msra.mxu0 0.0
    %1406 = vmatprep.subr.mxu0 0.0
    %1407 = vmatpush2.msra.mxu0 0.0
    %1408 = vmatprep.subr.mxu0 0.0
    %1409 = vmatpush2.msra.mxu0 0.0
    %1410 = vmatprep.subr.mxu0 0.0
    %1411 = vmatpush2.msra.mxu0 0.0
    %1412 = vmatprep.subr.mxu0 0.0
    %1413 = vmatpush2.msra.mxu0 0.0
    %1414 = vmatprep.subr.mxu0 0.0
    %1415 = vmatpush2.msra.mxu0 0.0
    %1416 = vmatprep.subr.mxu0 0.0
    %1417 = vmatpush2.msra.mxu0 0.0
    %1418 = vmatprep.subr.mxu0 0.0
    %1419 = vmatpush2.msra.mxu0 0.0
    %1420 = vmatprep.subr.mxu0 0.0
    %1421 = vmatpush2.msra.mxu0 0.0
    %1422 = vmatprep.subr.mxu0 0.0
    %1423 = vmatpush2.msra.mxu0 0.0
    %1424 = vmatprep.subr.mxu0 0.0
    %1425 = vmatpush2.msra.mxu0 0.0
    %1426 = vmatprep.subr.mxu0 0.0
    %1427 = vmatpush2.msra.mxu0 0.0
    %1428 = vmatprep.mubr.f32.mxu0 0.0
    %1429 = vmatmul.mubr.f32.gmra.mxu0 %v1196
    %v1430 = vpop.f32.mrf.mxu0
    %v1431 = vadd.f32 %v1361, %v1430
    %v1432 = vpop.f32.mrf.mxu0
    %1433 = vdwg.mxu0
    %v1434 = vadd.f32 %v1431, %v646
    %v1435 = vtanh.pop %v1434
    %v1436 = vmul.f32 %v1435, 0.5
    %v1437 = vadd.f32 %v1436, 0.5
    %v1438 = vmul.f32 %v1437, %v1186
    %1440 = vrot.lane.b32.xlu0 %v1435, 64
    %v1441 = vpop.permute.xlu0 %1440
    %v1443 = vmul.f32 %v1437, %v1441
    %1445 = vrot.lane.b32.xlu0 %v1443, 32
    %v1446 = vpop.permute.xlu0 %1445
    %v1448 = vadd.f32 %v1438, %v1446
    %v1449 = vtanh.pop %v1448
    %1451 = vrot.lane.b32.xlu0 %v1449, 64
    %v1452 = vpop.permute.xlu0 %1451
    %v1454 = vmul.f32 %v1437, %v1452
    %1456 = vrot.lane.b32.xlu0 %v1288, 32
    %v1457 = vpop.permute.xlu0 %1456
    %v1458 = vsel %vm311, %v1457, 0
    %1460 = vmatprep.subr.mxu0 0.0
    %1461 = vmatpush1.msra.mxu0 0.0
    %1462 = vmatprep.subr.mxu0 0.0
    %1463 = vmatpush1.msra.mxu0 0.0
    %1464 = vmatprep.subr.mxu0 0.0
    %1465 = vmatpush1.msra.mxu0 0.0
    %1466 = vmatprep.subr.mxu0 0.0
    %1467 = vmatpush1.msra.mxu0 0.0
    %1468 = vmatprep.subr.mxu0 0.0
    %1469 = vmatpush1.msra.mxu0 0.0
    %1470 = vmatprep.subr.mxu0 0.0
    %1471 = vmatpush1.msra.mxu0 0.0
    %1472 = vmatprep.subr.mxu0 0.0
    %1473 = vmatpush1.msra.mxu0 0.0
    %1474 = vmatprep.subr.mxu0 0.0
    %1475 = vmatpush1.msra.mxu0 0.0
    %1476 = vmatprep.subr.mxu0 0.0
    %1477 = vmatpush1.msra.mxu0 0.0
    %1478 = vmatprep.subr.mxu0 0.0
    %1479 = vmatpush1.msra.mxu0 0.0
    %1480 = vmatprep.subr.mxu0 0.0
    %1481 = vmatpush1.msra.mxu0 0.0
    %1482 = vmatprep.subr.mxu0 0.0
    %1483 = vmatpush1.msra.mxu0 0.0
    %1484 = vmatprep.subr.mxu0 0.0
    %1485 = vmatpush1.msra.mxu0 %v38
    %1486 = vmatprep.subr.mxu0 0.0
    %1487 = vmatpush1.msra.mxu0 %v37
    %1488 = vmatprep.subr.mxu0 0.0
    %1489 = vmatpush1.msra.mxu0 %v36
    %1490 = vmatprep.subr.mxu0 0.0
    %1491 = vmatpush1.msra.mxu0 %v35
    %1492 = vmatprep.subr.mxu0 0.0
    %1493 = vmatpush2.msra.mxu0 0.0
    %1494 = vmatprep.subr.mxu0 0.0
    %1495 = vmatpush2.msra.mxu0 0.0
    %1496 = vmatprep.subr.mxu0 0.0
    %1497 = vmatpush2.msra.mxu0 0.0
    %1498 = vmatprep.subr.mxu0 0.0
    %1499 = vmatpush2.msra.mxu0 0.0
    %1500 = vmatprep.subr.mxu0 0.0
    %1501 = vmatpush2.msra.mxu0 0.0
    %1502 = vmatprep.subr.mxu0 0.0
    %1503 = vmatpush2.msra.mxu0 0.0
    %1504 = vmatprep.subr.mxu0 0.0
    %1505 = vmatpush2.msra.mxu0 0.0
    %1506 = vmatprep.subr.mxu0 0.0
    %1507 = vmatpush2.msra.mxu0 0.0
    %1508 = vmatprep.subr.mxu0 0.0
    %1509 = vmatpush2.msra.mxu0 0.0
    %1510 = vmatprep.subr.mxu0 0.0
    %1511 = vmatpush2.msra.mxu0 0.0
    %1512 = vmatprep.subr.mxu0 0.0
    %1513 = vmatpush2.msra.mxu0 0.0
    %1514 = vmatprep.subr.mxu0 0.0
    %1515 = vmatpush2.msra.mxu0 0.0
    %1516 = vmatprep.subr.mxu0 0.0
    %1517 = vmatpush2.msra.mxu0 0.0
    %1518 = vmatprep.subr.mxu0 0.0
    %1519 = vmatpush2.msra.mxu0 0.0
    %1520 = vmatprep.subr.mxu0 0.0
    %1521 = vmatpush2.msra.mxu0 0.0
    %1522 = vmatprep.subr.mxu0 0.0
    %1523 = vmatpush2.msra.mxu0 0.0
    %1524 = vmatprep.mubr.f32.mxu0 0.0
    %1525 = vmatmul.mubr.f32.gmra.mxu0 %v1458
    %v1526 = vpop.f32.mrf.mxu0
    %v1527 = vadd.f32 0.0, %v1526
    %v1528 = vpop.f32.mrf.mxu0
    %1529 = vdwg.mxu0
    %v1530 = vadd.f32 %v298, %v1527
    %v1531 = vtanh.pop %v1530
    %v1532 = vmul.f32 %v1531, 0.5
    %v1533 = vadd.f32 %v1532, 0.5
    %v1534 = vmul.f32 %v1533, %v1282
    %1536 = vrot.lane.b32.xlu0 %v1531, 64
    %v1537 = vpop.permute.xlu0 %1536
    %v1539 = vmul.f32 %v1533, %v1537
    %1541 = vrot.lane.b32.xlu0 %v1539, 32
    %v1542 = vpop.permute.xlu0 %1541
    %v1544 = vadd.f32 %v1534, %v1542
    %v1545 = vtanh.pop %v1544
    %1547 = vrot.lane.b32.xlu0 %v1545, 64
    %v1548 = vpop.permute.xlu0 %1547
    %v1550 = vmul.f32 %v1533, %v1548
    %1552 = vrot.lane.b32.xlu0 %v1454, 32
    %v1553 = vpop.permute.xlu0 %1552
    %v1554 = vsel %vm311, %v1553, 0
    %1556 = vmatprep.subr.mxu0 0.0
    %1557 = vmatpush1.msra.mxu0 0.0
    %1558 = vmatprep.subr.mxu0 0.0
    %1559 = vmatpush1.msra.mxu0 0.0
    %1560 = vmatprep.subr.mxu0 0.0
    %1561 = vmatpush1.msra.mxu0 0.0
    %1562 = vmatprep.subr.mxu0 0.0
    %1563 = vmatpush1.msra.mxu0 0.0
    %1564 = vmatprep.subr.mxu0 0.0
    %1565 = vmatpush1.msra.mxu0 0.0
    %1566 = vmatprep.subr.mxu0 0.0
    %1567 = vmatpush1.msra.mxu0 0.0
    %1568 = vmatprep.subr.mxu0 0.0
    %1569 = vmatpush1.msra.mxu0 0.0
    %1570 = vmatprep.subr.mxu0 0.0
    %1571 = vmatpush1.msra.mxu0 0.0
    %1572 = vmatprep.subr.mxu0 0.0
    %1573 = vmatpush1.msra.mxu0 0.0
    %1574 = vmatprep.subr.mxu0 0.0
    %1575 = vmatpush1.msra.mxu0 0.0
    %1576 = vmatprep.subr.mxu0 0.0
    %1577 = vmatpush1.msra.mxu0 0.0
    %1578 = vmatprep.subr.mxu0 0.0
    %1579 = vmatpush1.msra.mxu0 0.0
    %1580 = vmatprep.subr.mxu0 0.0
    %1581 = vmatpush1.msra.mxu0 %v43
    %1582 = vmatprep.subr.mxu0 0.0
    %1583 = vmatpush1.msra.mxu0 %v42
    %1584 = vmatprep.subr.mxu0 0.0
    %1585 = vmatpush1.msra.mxu0 %v41
    %1586 = vmatprep.subr.mxu0 0.0
    %1587 = vmatpush1.msra.mxu0 %v40
    %1588 = vmatprep.subr.mxu0 0.0
    %1589 = vmatpush2.msra.mxu0 0.0
    %1590 = vmatprep.subr.mxu0 0.0
    %1591 = vmatpush2.msra.mxu0 0.0
    %1592 = vmatprep.subr.mxu0 0.0
    %1593 = vmatpush2.msra.mxu0 0.0
    %1594 = vmatprep.subr.mxu0 0.0
    %1595 = vmatpush2.msra.mxu0 0.0
    %1596 = vmatprep.subr.mxu0 0.0
    %1597 = vmatpush2.msra.mxu0 0.0
    %1598 = vmatprep.subr.mxu0 0.0
    %1599 = vmatpush2.msra.mxu0 0.0
    %1600 = vmatprep.subr.mxu0 0.0
    %1601 = vmatpush2.msra.mxu0 0.0
    %1602 = vmatprep.subr.mxu0 0.0
    %1603 = vmatpush2.msra.mxu0 0.0
    %1604 = vmatprep.subr.mxu0 0.0
    %1605 = vmatpush2.msra.mxu0 0.0
    %1606 = vmatprep.subr.mxu0 0.0
    %1607 = vmatpush2.msra.mxu0 0.0
    %1608 = vmatprep.subr.mxu0 0.0
    %1609 = vmatpush2.msra.mxu0 0.0
    %1610 = vmatprep.subr.mxu0 0.0
    %1611 = vmatpush2.msra.mxu0 0.0
    %1612 = vmatprep.subr.mxu0 0.0
    %1613 = vmatpush2.msra.mxu0 0.0
    %1614 = vmatprep.subr.mxu0 0.0
    %1615 = vmatpush2.msra.mxu0 0.0
    %1616 = vmatprep.subr.mxu0 0.0
    %1617 = vmatpush2.msra.mxu0 0.0
    %1618 = vmatprep.subr.mxu0 0.0
    %1619 = vmatpush2.msra.mxu0 0.0
    %1620 = vmatprep.mubr.f32.mxu0 0.0
    %1621 = vmatmul.mubr.f32.gmra.mxu0 %v1554
    %v1622 = vpop.f32.mrf.mxu0
    %v1623 = vadd.f32 0.0, %v1622
    %v1624 = vpop.f32.mrf.mxu0
    %1625 = vdwg.mxu0
    %1626 = vmatprep.subr.mxu0 0.0
    %1627 = vmatpush1.msra.mxu0 0.0
    %1628 = vmatprep.subr.mxu0 0.0
    %1629 = vmatpush1.msra.mxu0 0.0
    %1630 = vmatprep.subr.mxu0 0.0
    %1631 = vmatpush1.msra.mxu0 0.0
    %1632 = vmatprep.subr.mxu0 0.0
    %1633 = vmatpush1.msra.mxu0 0.0
    %1634 = vmatprep.subr.mxu0 0.0
    %1635 = vmatpush1.msra.mxu0 0.0
    %1636 = vmatprep.subr.mxu0 0.0
    %1637 = vmatpush1.msra.mxu0 0.0
    %1638 = vmatprep.subr.mxu0 0.0
    %1639 = vmatpush1.msra.mxu0 0.0
    %1640 = vmatprep.subr.mxu0 0.0
    %1641 = vmatpush1.msra.mxu0 0.0
    %1642 = vmatprep.subr.mxu0 0.0
    %1643 = vmatpush1.msra.mxu0 0.0
    %1644 = vmatprep.subr.mxu0 0.0
    %1645 = vmatpush1.msra.mxu0 0.0
    %1646 = vmatprep.subr.mxu0 0.0
    %1647 = vmatpush1.msra.mxu0 0.0
    %1648 = vmatprep.subr.mxu0 0.0
    %1649 = vmatpush1.msra.mxu0 0.0
    %1650 = vmatprep.subr.mxu0 0.0
    %1651 = vmatpush1.msra.mxu0 %v48
    %1652 = vmatprep.subr.mxu0 0.0
    %1653 = vmatpush1.msra.mxu0 %v47
    %1654 = vmatprep.subr.mxu0 0.0
    %1655 = vmatpush1.msra.mxu0 %v46
    %1656 = vmatprep.subr.mxu0 0.0
    %1657 = vmatpush1.msra.mxu0 %v45
    %1658 = vmatprep.subr.mxu0 0.0
    %1659 = vmatpush2.msra.mxu0 0.0
    %1660 = vmatprep.subr.mxu0 0.0
    %1661 = vmatpush2.msra.mxu0 0.0
    %1662 = vmatprep.subr.mxu0 0.0
    %1663 = vmatpush2.msra.mxu0 0.0
    %1664 = vmatprep.subr.mxu0 0.0
    %1665 = vmatpush2.msra.mxu0 0.0
    %1666 = vmatprep.subr.mxu0 0.0
    %1667 = vmatpush2.msra.mxu0 0.0
    %1668 = vmatprep.subr.mxu0 0.0
    %1669 = vmatpush2.msra.mxu0 0.0
    %1670 = vmatprep.subr.mxu0 0.0
    %1671 = vmatpush2.msra.mxu0 0.0
    %1672 = vmatprep.subr.mxu0 0.0
    %1673 = vmatpush2.msra.mxu0 0.0
    %1674 = vmatprep.subr.mxu0 0.0
    %1675 = vmatpush2.msra.mxu0 0.0
    %1676 = vmatprep.subr.mxu0 0.0
    %1677 = vmatpush2.msra.mxu0 0.0
    %1678 = vmatprep.subr.mxu0 0.0
    %1679 = vmatpush2.msra.mxu0 0.0
    %1680 = vmatprep.subr.mxu0 0.0
    %1681 = vmatpush2.msra.mxu0 0.0
    %1682 = vmatprep.subr.mxu0 0.0
    %1683 = vmatpush2.msra.mxu0 0.0
    %1684 = vmatprep.subr.mxu0 0.0
    %1685 = vmatpush2.msra.mxu0 0.0
    %1686 = vmatprep.subr.mxu0 0.0
    %1687 = vmatpush2.msra.mxu0 0.0
    %1688 = vmatprep.subr.mxu0 0.0
    %1689 = vmatpush2.msra.mxu0 0.0
    %1690 = vmatprep.mubr.f32.mxu0 0.0
    %1691 = vmatmul.mubr.f32.gmra.mxu0 %v1458
    %v1692 = vpop.f32.mrf.mxu0
    %v1693 = vadd.f32 %v1623, %v1692
    %v1694 = vpop.f32.mrf.mxu0
    %1695 = vdwg.mxu0
    %v1696 = vadd.f32 %v1693, %v646
    %v1697 = vtanh.pop %v1696
    %v1698 = vmul.f32 %v1697, 0.5
    %v1699 = vadd.f32 %v1698, 0.5
    %v1700 = vmul.f32 %v1699, %v1448
    %1702 = vrot.lane.b32.xlu0 %v1697, 64
    %v1703 = vpop.permute.xlu0 %1702
    %v1705 = vmul.f32 %v1699, %v1703
    %1707 = vrot.lane.b32.xlu0 %v1705, 32
    %v1708 = vpop.permute.xlu0 %1707
    %v1710 = vadd.f32 %v1700, %v1708
    %v1711 = vtanh.pop %v1710
    %1713 = vrot.lane.b32.xlu0 %v1711, 64
    %v1714 = vpop.permute.xlu0 %1713
    %v1716 = vmul.f32 %v1699, %v1714
    %1718 = vrot.lane.b32.xlu0 %v1550, 32
    %v1719 = vpop.permute.xlu0 %1718
    %v1720 = vsel %vm311, %v1719, 0
    %1722 = vmatprep.subr.mxu0 0.0
    %1723 = vmatpush1.msra.mxu0 0.0
    %1724 = vmatprep.subr.mxu0 0.0
    %1725 = vmatpush1.msra.mxu0 0.0
    %1726 = vmatprep.subr.mxu0 0.0
    %1727 = vmatpush1.msra.mxu0 0.0
    %1728 = vmatprep.subr.mxu0 0.0
    %1729 = vmatpush1.msra.mxu0 0.0
    %1730 = vmatprep.subr.mxu0 0.0
    %1731 = vmatpush1.msra.mxu0 0.0
    %1732 = vmatprep.subr.mxu0 0.0
    %1733 = vmatpush1.msra.mxu0 0.0
    %1734 = vmatprep.subr.mxu0 0.0
    %1735 = vmatpush1.msra.mxu0 0.0
    %1736 = vmatprep.subr.mxu0 0.0
    %1737 = vmatpush1.msra.mxu0 0.0
    %1738 = vmatprep.subr.mxu0 0.0
    %1739 = vmatpush1.msra.mxu0 0.0
    %1740 = vmatprep.subr.mxu0 0.0
    %1741 = vmatpush1.msra.mxu0 0.0
    %1742 = vmatprep.subr.mxu0 0.0
    %1743 = vmatpush1.msra.mxu0 0.0
    %1744 = vmatprep.subr.mxu0 0.0
    %1745 = vmatpush1.msra.mxu0 0.0
    %1746 = vmatprep.subr.mxu0 0.0
    %1747 = vmatpush1.msra.mxu0 %v38
    %1748 = vmatprep.subr.mxu0 0.0
    %1749 = vmatpush1.msra.mxu0 %v37
    %1750 = vmatprep.subr.mxu0 0.0
    %1751 = vmatpush1.msra.mxu0 %v36
    %1752 = vmatprep.subr.mxu0 0.0
    %1753 = vmatpush1.msra.mxu0 %v35
    %1754 = vmatprep.subr.mxu0 0.0
    %1755 = vmatpush2.msra.mxu0 0.0
    %1756 = vmatprep.subr.mxu0 0.0
    %1757 = vmatpush2.msra.mxu0 0.0
    %1758 = vmatprep.subr.mxu0 0.0
    %1759 = vmatpush2.msra.mxu0 0.0
    %1760 = vmatprep.subr.mxu0 0.0
    %1761 = vmatpush2.msra.mxu0 0.0
    %1762 = vmatprep.subr.mxu0 0.0
    %1763 = vmatpush2.msra.mxu0 0.0
    %1764 = vmatprep.subr.mxu0 0.0
    %1765 = vmatpush2.msra.mxu0 0.0
    %1766 = vmatprep.subr.mxu0 0.0
    %1767 = vmatpush2.msra.mxu0 0.0
    %1768 = vmatprep.subr.mxu0 0.0
    %1769 = vmatpush2.msra.mxu0 0.0
    %1770 = vmatprep.subr.mxu0 0.0
    %1771 = vmatpush2.msra.mxu0 0.0
    %1772 = vmatprep.subr.mxu0 0.0
    %1773 = vmatpush2.msra.mxu0 0.0
    %1774 = vmatprep.subr.mxu0 0.0
    %1775 = vmatpush2.msra.mxu0 0.0
    %1776 = vmatprep.subr.mxu0 0.0
    %1777 = vmatpush2.msra.mxu0 0.0
    %1778 = vmatprep.subr.mxu0 0.0
    %1779 = vmatpush2.msra.mxu0 0.0
    %1780 = vmatprep.subr.mxu0 0.0
    %1781 = vmatpush2.msra.mxu0 0.0
    %1782 = vmatprep.subr.mxu0 0.0
    %1783 = vmatpush2.msra.mxu0 0.0
    %1784 = vmatprep.subr.mxu0 0.0
    %1785 = vmatpush2.msra.mxu0 0.0
    %1786 = vmatprep.mubr.f32.mxu0 0.0
    %1787 = vmatmul.mubr.f32.gmra.mxu0 %v1720
    %v1788 = vpop.f32.mrf.mxu0
    %v1789 = vadd.f32 0.0, %v1788
    %v1790 = vpop.f32.mrf.mxu0
    %1791 = vdwg.mxu0
    %v1792 = vadd.f32 %v303, %v1789
    %v1793 = vtanh.pop %v1792
    %v1794 = vmul.f32 %v1793, 0.5
    %v1795 = vadd.f32 %v1794, 0.5
    %v1796 = vmul.f32 %v1795, %v1544
    %1798 = vrot.lane.b32.xlu0 %v1793, 64
    %v1799 = vpop.permute.xlu0 %1798
    %v1801 = vmul.f32 %v1795, %v1799
    %1803 = vrot.lane.b32.xlu0 %v1801, 32
    %v1804 = vpop.permute.xlu0 %1803
    %v1806 = vadd.f32 %v1796, %v1804
    %v1807 = vtanh.pop %v1806
    %1809 = vrot.lane.b32.xlu0 %v1807, 64
    %v1810 = vpop.permute.xlu0 %1809
    %v1812 = vmul.f32 %v1795, %v1810
    %1814 = vrot.lane.b32.xlu0 %v1716, 32
    %v1815 = vpop.permute.xlu0 %1814
    %v1816 = vsel %vm311, %v1815, 0
    %1818 = vmatprep.subr.mxu0 0.0
    %1819 = vmatpush1.msra.mxu0 0.0
    %1820 = vmatprep.subr.mxu0 0.0
    %1821 = vmatpush1.msra.mxu0 0.0
    %1822 = vmatprep.subr.mxu0 0.0
    %1823 = vmatpush1.msra.mxu0 0.0
    %1824 = vmatprep.subr.mxu0 0.0
    %1825 = vmatpush1.msra.mxu0 0.0
    %1826 = vmatprep.subr.mxu0 0.0
    %1827 = vmatpush1.msra.mxu0 0.0
    %1828 = vmatprep.subr.mxu0 0.0
    %1829 = vmatpush1.msra.mxu0 0.0
    %1830 = vmatprep.subr.mxu0 0.0
    %1831 = vmatpush1.msra.mxu0 0.0
    %1832 = vmatprep.subr.mxu0 0.0
    %1833 = vmatpush1.msra.mxu0 0.0
    %1834 = vmatprep.subr.mxu0 0.0
    %1835 = vmatpush1.msra.mxu0 0.0
    %1836 = vmatprep.subr.mxu0 0.0
    %1837 = vmatpush1.msra.mxu0 0.0
    %1838 = vmatprep.subr.mxu0 0.0
    %1839 = vmatpush1.msra.mxu0 0.0
    %1840 = vmatprep.subr.mxu0 0.0
    %1841 = vmatpush1.msra.mxu0 0.0
    %1842 = vmatprep.subr.mxu0 0.0
    %1843 = vmatpush1.msra.mxu0 %v43
    %1844 = vmatprep.subr.mxu0 0.0
    %1845 = vmatpush1.msra.mxu0 %v42
    %1846 = vmatprep.subr.mxu0 0.0
    %1847 = vmatpush1.msra.mxu0 %v41
    %1848 = vmatprep.subr.mxu0 0.0
    %1849 = vmatpush1.msra.mxu0 %v40
    %1850 = vmatprep.subr.mxu0 0.0
    %1851 = vmatpush2.msra.mxu0 0.0
    %1852 = vmatprep.subr.mxu0 0.0
    %1853 = vmatpush2.msra.mxu0 0.0
    %1854 = vmatprep.subr.mxu0 0.0
    %1855 = vmatpush2.msra.mxu0 0.0
    %1856 = vmatprep.subr.mxu0 0.0
    %1857 = vmatpush2.msra.mxu0 0.0
    %1858 = vmatprep.subr.mxu0 0.0
    %1859 = vmatpush2.msra.mxu0 0.0
    %1860 = vmatprep.subr.mxu0 0.0
    %1861 = vmatpush2.msra.mxu0 0.0
    %1862 = vmatprep.subr.mxu0 0.0
    %1863 = vmatpush2.msra.mxu0 0.0
    %1864 = vmatprep.subr.mxu0 0.0
    %1865 = vmatpush2.msra.mxu0 0.0
    %1866 = vmatprep.subr.mxu0 0.0
    %1867 = vmatpush2.msra.mxu0 0.0
    %1868 = vmatprep.subr.mxu0 0.0
    %1869 = vmatpush2.msra.mxu0 0.0
    %1870 = vmatprep.subr.mxu0 0.0
    %1871 = vmatpush2.msra.mxu0 0.0
    %1872 = vmatprep.subr.mxu0 0.0
    %1873 = vmatpush2.msra.mxu0 0.0
    %1874 = vmatprep.subr.mxu0 0.0
    %1875 = vmatpush2.msra.mxu0 0.0
    %1876 = vmatprep.subr.mxu0 0.0
    %1877 = vmatpush2.msra.mxu0 0.0
    %1878 = vmatprep.subr.mxu0 0.0
    %1879 = vmatpush2.msra.mxu0 0.0
    %1880 = vmatprep.subr.mxu0 0.0
    %1881 = vmatpush2.msra.mxu0 0.0
    %1882 = vmatprep.mubr.f32.mxu0 0.0
    %1883 = vmatmul.mubr.f32.gmra.mxu0 %v1816
    %v1884 = vpop.f32.mrf.mxu0
    %v1885 = vadd.f32 0.0, %v1884
    %v1886 = vpop.f32.mrf.mxu0
    %1887 = vdwg.mxu0
    %1888 = vmatprep.subr.mxu0 0.0
    %1889 = vmatpush1.msra.mxu0 0.0
    %1890 = vmatprep.subr.mxu0 0.0
    %1891 = vmatpush1.msra.mxu0 0.0
    %1892 = vmatprep.subr.mxu0 0.0
    %1893 = vmatpush1.msra.mxu0 0.0
    %1894 = vmatprep.subr.mxu0 0.0
    %1895 = vmatpush1.msra.mxu0 0.0
    %1896 = vmatprep.subr.mxu0 0.0
    %1897 = vmatpush1.msra.mxu0 0.0
    %1898 = vmatprep.subr.mxu0 0.0
    %1899 = vmatpush1.msra.mxu0 0.0
    %1900 = vmatprep.subr.mxu0 0.0
    %1901 = vmatpush1.msra.mxu0 0.0
    %1902 = vmatprep.subr.mxu0 0.0
    %1903 = vmatpush1.msra.mxu0 0.0
    %1904 = vmatprep.subr.mxu0 0.0
    %1905 = vmatpush1.msra.mxu0 0.0
    %1906 = vmatprep.subr.mxu0 0.0
    %1907 = vmatpush1.msra.mxu0 0.0
    %1908 = vmatprep.subr.mxu0 0.0
    %1909 = vmatpush1.msra.mxu0 0.0
    %1910 = vmatprep.subr.mxu0 0.0
    %1911 = vmatpush1.msra.mxu0 0.0
    %1912 = vmatprep.subr.mxu0 0.0
    %1913 = vmatpush1.msra.mxu0 %v48
    %1914 = vmatprep.subr.mxu0 0.0
    %1915 = vmatpush1.msra.mxu0 %v47
    %1916 = vmatprep.subr.mxu0 0.0
    %1917 = vmatpush1.msra.mxu0 %v46
    %1918 = vmatprep.subr.mxu0 0.0
    %1919 = vmatpush1.msra.mxu0 %v45
    %1920 = vmatprep.subr.mxu0 0.0
    %1921 = vmatpush2.msra.mxu0 0.0
    %1922 = vmatprep.subr.mxu0 0.0
    %1923 = vmatpush2.msra.mxu0 0.0
    %1924 = vmatprep.subr.mxu0 0.0
    %1925 = vmatpush2.msra.mxu0 0.0
    %1926 = vmatprep.subr.mxu0 0.0
    %1927 = vmatpush2.msra.mxu0 0.0
    %1928 = vmatprep.subr.mxu0 0.0
    %1929 = vmatpush2.msra.mxu0 0.0
    %1930 = vmatprep.subr.mxu0 0.0
    %1931 = vmatpush2.msra.mxu0 0.0
    %1932 = vmatprep.subr.mxu0 0.0
    %1933 = vmatpush2.msra.mxu0 0.0
    %1934 = vmatprep.subr.mxu0 0.0
    %1935 = vmatpush2.msra.mxu0 0.0
    %1936 = vmatprep.subr.mxu0 0.0
    %1937 = vmatpush2.msra.mxu0 0.0
    %1938 = vmatprep.subr.mxu0 0.0
    %1939 = vmatpush2.msra.mxu0 0.0
    %1940 = vmatprep.subr.mxu0 0.0
    %1941 = vmatpush2.msra.mxu0 0.0
    %1942 = vmatprep.subr.mxu0 0.0
    %1943 = vmatpush2.msra.mxu0 0.0
    %1944 = vmatprep.subr.mxu0 0.0
    %1945 = vmatpush2.msra.mxu0 0.0
    %1946 = vmatprep.subr.mxu0 0.0
    %1947 = vmatpush2.msra.mxu0 0.0
    %1948 = vmatprep.subr.mxu0 0.0
    %1949 = vmatpush2.msra.mxu0 0.0
    %1950 = vmatprep.subr.mxu0 0.0
    %1951 = vmatpush2.msra.mxu0 0.0
    %1952 = vmatprep.mubr.f32.mxu0 0.0
    %1953 = vmatmul.mubr.f32.gmra.mxu0 %v1720
    %v1954 = vpop.f32.mrf.mxu0
    %v1955 = vadd.f32 %v1885, %v1954
    %v1956 = vpop.f32.mrf.mxu0
    %1957 = vdwg.mxu0
    %v1958 = vadd.f32 %v1955, %v646
    %v1959 = vtanh.pop %v1958
    %v1960 = vmul.f32 %v1959, 0.5
    %v1961 = vadd.f32 %v1960, 0.5
    %v1962 = vmul.f32 %v1961, %v1710
    %1964 = vrot.lane.b32.xlu0 %v1959, 64
    %v1965 = vpop.permute.xlu0 %1964
    %v1967 = vmul.f32 %v1961, %v1965
    %1969 = vrot.lane.b32.xlu0 %v1967, 32
    %v1970 = vpop.permute.xlu0 %1969
    %v1972 = vadd.f32 %v1962, %v1970
    %v1973 = vtanh.pop %v1972
    %1975 = vrot.lane.b32.xlu0 %v1973, 64
    %v1976 = vpop.permute.xlu0 %1975
    %v1978 = vmul.f32 %v1961, %v1976
    %1980 = vrot.lane.b32.xlu0 %v1812, 32
    %v1981 = vpop.permute.xlu0 %1980
    %v1982 = vsel %vm311, %v1981, 0
    %1984 = vmatprep.subr.mxu0 0.0
    %1985 = vmatpush1.msra.mxu0 0.0
    %1986 = vmatprep.subr.mxu0 0.0
    %1987 = vmatpush1.msra.mxu0 0.0
    %1988 = vmatprep.subr.mxu0 0.0
    %1989 = vmatpush1.msra.mxu0 0.0
    %1990 = vmatprep.subr.mxu0 0.0
    %1991 = vmatpush1.msra.mxu0 0.0
    %1992 = vmatprep.subr.mxu0 0.0
    %1993 = vmatpush1.msra.mxu0 0.0
    %1994 = vmatprep.subr.mxu0 0.0
    %1995 = vmatpush1.msra.mxu0 0.0
    %1996 = vmatprep.subr.mxu0 0.0
    %1997 = vmatpush1.msra.mxu0 0.0
    %1998 = vmatprep.subr.mxu0 0.0
    %1999 = vmatpush1.msra.mxu0 0.0
    %2000 = vmatprep.subr.mxu0 0.0
    %2001 = vmatpush1.msra.mxu0 0.0
    %2002 = vmatprep.subr.mxu0 0.0
    %2003 = vmatpush1.msra.mxu0 0.0
    %2004 = vmatprep.subr.mxu0 0.0
    %2005 = vmatpush1.msra.mxu0 0.0
    %2006 = vmatprep.subr.mxu0 0.0
    %2007 = vmatpush1.msra.mxu0 0.0
    %2008 = vmatprep.subr.mxu0 0.0
    %2009 = vmatpush1.msra.mxu0 %v38
    %2010 = vmatprep.subr.mxu0 0.0
    %2011 = vmatpush1.msra.mxu0 %v37
    %2012 = vmatprep.subr.mxu0 0.0
    %2013 = vmatpush1.msra.mxu0 %v36
    %2014 = vmatprep.subr.mxu0 0.0
    %2015 = vmatpush1.msra.mxu0 %v35
    %2016 = vmatprep.subr.mxu0 0.0
    %2017 = vmatpush2.msra.mxu0 0.0
    %2018 = vmatprep.subr.mxu0 0.0
    %2019 = vmatpush2.msra.mxu0 0.0
    %2020 = vmatprep.subr.mxu0 0.0
    %2021 = vmatpush2.msra.mxu0 0.0
    %2022 = vmatprep.subr.mxu0 0.0
    %2023 = vmatpush2.msra.mxu0 0.0
    %2024 = vmatprep.subr.mxu0 0.0
    %2025 = vmatpush2.msra.mxu0 0.0
    %2026 = vmatprep.subr.mxu0 0.0
    %2027 = vmatpush2.msra.mxu0 0.0
    %2028 = vmatprep.subr.mxu0 0.0
    %2029 = vmatpush2.msra.mxu0 0.0
    %2030 = vmatprep.subr.mxu0 0.0
    %2031 = vmatpush2.msra.mxu0 0.0
    %2032 = vmatprep.subr.mxu0 0.0
    %2033 = vmatpush2.msra.mxu0 0.0
    %2034 = vmatprep.subr.mxu0 0.0
    %2035 = vmatpush2.msra.mxu0 0.0
    %2036 = vmatprep.subr.mxu0 0.0
    %2037 = vmatpush2.msra.mxu0 0.0
    %2038 = vmatprep.subr.mxu0 0.0
    %2039 = vmatpush2.msra.mxu0 0.0
    %2040 = vmatprep.subr.mxu0 0.0
    %2041 = vmatpush2.msra.mxu0 0.0
    %2042 = vmatprep.subr.mxu0 0.0
    %2043 = vmatpush2.msra.mxu0 0.0
    %2044 = vmatprep.subr.mxu0 0.0
    %2045 = vmatpush2.msra.mxu0 0.0
    %2046 = vmatprep.subr.mxu0 0.0
    %2047 = vmatpush2.msra.mxu0 0.0
    %2048 = vmatprep.mubr.f32.mxu0 0.0
    %2049 = vmatmul.mubr.f32.gmra.mxu0 %v1982
    %v2050 = vpop.f32.mrf.mxu0
    %v2051 = vadd.f32 0.0, %v2050
    %v2052 = vpop.f32.mrf.mxu0
    %2053 = vdwg.mxu0
    %v2054 = vadd.f32 %v308, %v2051
    %v2055 = vtanh.pop %v2054
    %v2056 = vmul.f32 %v2055, 0.5
    %v2057 = vadd.f32 %v2056, 0.5
    %v2058 = vmul.f32 %v2057, %v1806
    %2060 = vrot.lane.b32.xlu0 %v2055, 64
    %v2061 = vpop.permute.xlu0 %2060
    %v2063 = vmul.f32 %v2057, %v2061
    %2065 = vrot.lane.b32.xlu0 %v2063, 32
    %v2066 = vpop.permute.xlu0 %2065
    %v2068 = vadd.f32 %v2058, %v2066
    %v2069 = vtanh.pop %v2068
    %2071 = vrot.lane.b32.xlu0 %v2069, 64
    %v2072 = vpop.permute.xlu0 %2071
    %v2074 = vmul.f32 %v2057, %v2072
    %2076 = vrot.lane.b32.xlu0 %v1978, 32
    %v2077 = vpop.permute.xlu0 %2076
    %v2078 = vsel %vm311, %v2077, 0
    %2080 = vmatprep.subr.mxu0 0.0
    %2081 = vmatpush1.msra.mxu0 0.0
    %2082 = vmatprep.subr.mxu0 0.0
    %2083 = vmatpush1.msra.mxu0 0.0
    %2084 = vmatprep.subr.mxu0 0.0
    %2085 = vmatpush1.msra.mxu0 0.0
    %2086 = vmatprep.subr.mxu0 0.0
    %2087 = vmatpush1.msra.mxu0 0.0
    %2088 = vmatprep.subr.mxu0 0.0
    %2089 = vmatpush1.msra.mxu0 0.0
    %2090 = vmatprep.subr.mxu0 0.0
    %2091 = vmatpush1.msra.mxu0 0.0
    %2092 = vmatprep.subr.mxu0 0.0
    %2093 = vmatpush1.msra.mxu0 0.0
    %2094 = vmatprep.subr.mxu0 0.0
    %2095 = vmatpush1.msra.mxu0 0.0
    %2096 = vmatprep.subr.mxu0 0.0
    %2097 = vmatpush1.msra.mxu0 0.0
    %2098 = vmatprep.subr.mxu0 0.0
    %2099 = vmatpush1.msra.mxu0 0.0
    %2100 = vmatprep.subr.mxu0 0.0
    %2101 = vmatpush1.msra.mxu0 0.0
    %2102 = vmatprep.subr.mxu0 0.0
    %2103 = vmatpush1.msra.mxu0 0.0
    %2104 = vmatprep.subr.mxu0 0.0
    %2105 = vmatpush1.msra.mxu0 %v43
    %2106 = vmatprep.subr.mxu0 0.0
    %2107 = vmatpush1.msra.mxu0 %v42
    %2108 = vmatprep.subr.mxu0 0.0
    %2109 = vmatpush1.msra.mxu0 %v41
    %2110 = vmatprep.subr.mxu0 0.0
    %2111 = vmatpush1.msra.mxu0 %v40
    %2112 = vmatprep.subr.mxu0 0.0
    %2113 = vmatpush2.msra.mxu0 0.0
    %2114 = vmatprep.subr.mxu0 0.0
    %2115 = vmatpush2.msra.mxu0 0.0
    %2116 = vmatprep.subr.mxu0 0.0
    %2117 = vmatpush2.msra.mxu0 0.0
    %2118 = vmatprep.subr.mxu0 0.0
    %2119 = vmatpush2.msra.mxu0 0.0
    %2120 = vmatprep.subr.mxu0 0.0
    %2121 = vmatpush2.msra.mxu0 0.0
    %2122 = vmatprep.subr.mxu0 0.0
    %2123 = vmatpush2.msra.mxu0 0.0
    %2124 = vmatprep.subr.mxu0 0.0
    %2125 = vmatpush2.msra.mxu0 0.0
    %2126 = vmatprep.subr.mxu0 0.0
    %2127 = vmatpush2.msra.mxu0 0.0
    %2128 = vmatprep.subr.mxu0 0.0
    %2129 = vmatpush2.msra.mxu0 0.0
    %2130 = vmatprep.subr.mxu0 0.0
    %2131 = vmatpush2.msra.mxu0 0.0
    %2132 = vmatprep.subr.mxu0 0.0
    %2133 = vmatpush2.msra.mxu0 0.0
    %2134 = vmatprep.subr.mxu0 0.0
    %2135 = vmatpush2.msra.mxu0 0.0
    %2136 = vmatprep.subr.mxu0 0.0
    %2137 = vmatpush2.msra.mxu0 0.0
    %2138 = vmatprep.subr.mxu0 0.0
    %2139 = vmatpush2.msra.mxu0 0.0
    %2140 = vmatprep.subr.mxu0 0.0
    %2141 = vmatpush2.msra.mxu0 0.0
    %2142 = vmatprep.subr.mxu0 0.0
    %2143 = vmatpush2.msra.mxu0 0.0
    %2144 = vmatprep.mubr.f32.mxu0 0.0
    %2145 = vmatmul.mubr.f32.gmra.mxu0 %v2078
    %v2146 = vpop.f32.mrf.mxu0
    %v2147 = vadd.f32 0.0, %v2146
    %v2148 = vpop.f32.mrf.mxu0
    %2149 = vdwg.mxu0
    %2150 = vmatprep.subr.mxu0 0.0
    %2151 = vmatpush1.msra.mxu0 0.0
    %2152 = vmatprep.subr.mxu0 0.0
    %2153 = vmatpush1.msra.mxu0 0.0
    %2154 = vmatprep.subr.mxu0 0.0
    %2155 = vmatpush1.msra.mxu0 0.0
    %2156 = vmatprep.subr.mxu0 0.0
    %2157 = vmatpush1.msra.mxu0 0.0
    %2158 = vmatprep.subr.mxu0 0.0
    %2159 = vmatpush1.msra.mxu0 0.0
    %2160 = vmatprep.subr.mxu0 0.0
    %2161 = vmatpush1.msra.mxu0 0.0
    %2162 = vmatprep.subr.mxu0 0.0
    %2163 = vmatpush1.msra.mxu0 0.0
    %2164 = vmatprep.subr.mxu0 0.0
    %2165 = vmatpush1.msra.mxu0 0.0
    %2166 = vmatprep.subr.mxu0 0.0
    %2167 = vmatpush1.msra.mxu0 0.0
    %2168 = vmatprep.subr.mxu0 0.0
    %2169 = vmatpush1.msra.mxu0 0.0
    %2170 = vmatprep.subr.mxu0 0.0
    %2171 = vmatpush1.msra.mxu0 0.0
    %2172 = vmatprep.subr.mxu0 0.0
    %2173 = vmatpush1.msra.mxu0 0.0
    %2174 = vmatprep.subr.mxu0 0.0
    %2175 = vmatpush1.msra.mxu0 %v48
    %2176 = vmatprep.subr.mxu0 0.0
    %2177 = vmatpush1.msra.mxu0 %v47
    %2178 = vmatprep.subr.mxu0 0.0
    %2179 = vmatpush1.msra.mxu0 %v46
    %2180 = vmatprep.subr.mxu0 0.0
    %2181 = vmatpush1.msra.mxu0 %v45
    %2182 = vmatprep.subr.mxu0 0.0
    %2183 = vmatpush2.msra.mxu0 0.0
    %2184 = vmatprep.subr.mxu0 0.0
    %2185 = vmatpush2.msra.mxu0 0.0
    %2186 = vmatprep.subr.mxu0 0.0
    %2187 = vmatpush2.msra.mxu0 0.0
    %2188 = vmatprep.subr.mxu0 0.0
    %2189 = vmatpush2.msra.mxu0 0.0
    %2190 = vmatprep.subr.mxu0 0.0
    %2191 = vmatpush2.msra.mxu0 0.0
    %2192 = vmatprep.subr.mxu0 0.0
    %2193 = vmatpush2.msra.mxu0 0.0
    %2194 = vmatprep.subr.mxu0 0.0
    %2195 = vmatpush2.msra.mxu0 0.0
    %2196 = vmatprep.subr.mxu0 0.0
    %2197 = vmatpush2.msra.mxu0 0.0
    %2198 = vmatprep.subr.mxu0 0.0
    %2199 = vmatpush2.msra.mxu0 0.0
    %2200 = vmatprep.subr.mxu0 0.0
    %2201 = vmatpush2.msra.mxu0 0.0
    %2202 = vmatprep.subr.mxu0 0.0
    %2203 = vmatpush2.msra.mxu0 0.0
    %2204 = vmatprep.subr.mxu0 0.0
    %2205 = vmatpush2.msra.mxu0 0.0
    %2206 = vmatprep.subr.mxu0 0.0
    %2207 = vmatpush2.msra.mxu0 0.0
    %2208 = vmatprep.subr.mxu0 0.0
    %2209 = vmatpush2.msra.mxu0 0.0
    %2210 = vmatprep.subr.mxu0 0.0
    %2211 = vmatpush2.msra.mxu0 0.0
    %2212 = vmatprep.subr.mxu0 0.0
    %2213 = vmatpush2.msra.mxu0 0.0
    %2214 = vmatprep.mubr.f32.mxu0 0.0
    %2215 = vmatmul.mubr.f32.gmra.mxu0 %v1982
    %v2216 = vpop.f32.mrf.mxu0
    %v2217 = vadd.f32 %v2147, %v2216
    %v2218 = vpop.f32.mrf.mxu0
    %2219 = vdwg.mxu0
    %v2220 = vadd.f32 %v2217, %v646
    %v2221 = vtanh.pop %v2220
    %v2222 = vmul.f32 %v2221, 0.5
    %v2223 = vadd.f32 %v2222, 0.5
    %v2224 = vmul.f32 %v2223, %v1972
    %2226 = vrot.lane.b32.xlu0 %v2221, 64
    %v2227 = vpop.permute.xlu0 %2226
    %v2229 = vmul.f32 %v2223, %v2227
    %2231 = vrot.lane.b32.xlu0 %v2229, 32
    %v2232 = vpop.permute.xlu0 %2231
    %v2234 = vadd.f32 %v2224, %v2232
    %v2235 = vtanh.pop %v2234
    %2237 = vrot.lane.b32.xlu0 %v2235, 64
    %v2238 = vpop.permute.xlu0 %2237
    %v2240 = vmul.f32 %v2223, %v2238
    %2242 = vrot.lane.b32.xlu0 %v2240, 32
    %v2243 = vpop.permute.xlu0 %2242
    %v2244 = vsel %vm311, %v2243, 0
    %2246 = vmatprep.subr.mxu0 0.0
    %2247 = vmatpush1.msra.mxu0 0.0
    %2248 = vmatprep.subr.mxu0 0.0
    %2249 = vmatpush1.msra.mxu0 0.0
    %2250 = vmatprep.subr.mxu0 0.0
    %2251 = vmatpush1.msra.mxu0 0.0
    %2252 = vmatprep.subr.mxu0 0.0
    %2253 = vmatpush1.msra.mxu0 0.0
    %2254 = vmatprep.subr.mxu0 0.0
    %2255 = vmatpush1.msra.mxu0 0.0
    %2256 = vmatprep.subr.mxu0 0.0
    %2257 = vmatpush1.msra.mxu0 0.0
    %2258 = vmatprep.subr.mxu0 0.0
    %2259 = vmatpush1.msra.mxu0 0.0
    %2260 = vmatprep.subr.mxu0 0.0
    %2261 = vmatpush1.msra.mxu0 0.0
    %2262 = vmatprep.subr.mxu0 0.0
    %2263 = vmatpush1.msra.mxu0 0.0
    %2264 = vmatprep.subr.mxu0 0.0
    %2265 = vmatpush1.msra.mxu0 0.0
    %2266 = vmatprep.subr.mxu0 0.0
    %2267 = vmatpush1.msra.mxu0 0.0
    %2268 = vmatprep.subr.mxu0 0.0
    %2269 = vmatpush1.msra.mxu0 0.0
    %2270 = vmatprep.subr.mxu0 0.0
    %2271 = vmatpush1.msra.mxu0 %v43
    %2272 = vmatprep.subr.mxu0 0.0
    %2273 = vmatpush1.msra.mxu0 %v42
    %2274 = vmatprep.subr.mxu0 0.0
    %2275 = vmatpush1.msra.mxu0 %v41
    %2276 = vmatprep.subr.mxu0 0.0
    %2277 = vmatpush1.msra.mxu0 %v40
    %2278 = vmatprep.subr.mxu0 0.0
    %2279 = vmatpush2.msra.mxu0 0.0
    %2280 = vmatprep.subr.mxu0 0.0
    %2281 = vmatpush2.msra.mxu0 0.0
    %2282 = vmatprep.subr.mxu0 0.0
    %2283 = vmatpush2.msra.mxu0 0.0
    %2284 = vmatprep.subr.mxu0 0.0
    %2285 = vmatpush2.msra.mxu0 0.0
    %2286 = vmatprep.subr.mxu0 0.0
    %2287 = vmatpush2.msra.mxu0 0.0
    %2288 = vmatprep.subr.mxu0 0.0
    %2289 = vmatpush2.msra.mxu0 0.0
    %2290 = vmatprep.subr.mxu0 0.0
    %2291 = vmatpush2.msra.mxu0 0.0
    %2292 = vmatprep.subr.mxu0 0.0
    %2293 = vmatpush2.msra.mxu0 0.0
    %2294 = vmatprep.subr.mxu0 0.0
    %2295 = vmatpush2.msra.mxu0 0.0
    %2296 = vmatprep.subr.mxu0 0.0
    %2297 = vmatpush2.msra.mxu0 0.0
    %2298 = vmatprep.subr.mxu0 0.0
    %2299 = vmatpush2.msra.mxu0 0.0
    %2300 = vmatprep.subr.mxu0 0.0
    %2301 = vmatpush2.msra.mxu0 0.0
    %2302 = vmatprep.subr.mxu0 0.0
    %2303 = vmatpush2.msra.mxu0 0.0
    %2304 = vmatprep.subr.mxu0 0.0
    %2305 = vmatpush2.msra.mxu0 0.0
    %2306 = vmatprep.subr.mxu0 0.0
    %2307 = vmatpush2.msra.mxu0 0.0
    %2308 = vmatprep.subr.mxu0 0.0
    %2309 = vmatpush2.msra.mxu0 0.0
    %2310 = vmatprep.mubr.f32.mxu0 0.0
    %2311 = vmatmul.mubr.f32.gmra.mxu0 %v2244
    %v2312 = vpop.f32.mrf.mxu0
    %v2313 = vadd.f32 0.0, %v2312
    %v2314 = vpop.f32.mrf.mxu0
    %2315 = vdwg.mxu0
    %2317 = vrot.lane.b32.xlu0 %v2074, 32
    %v2318 = vpop.permute.xlu0 %2317
    %v2319 = vsel %vm311, %v2318, 0
    %2321 = vmatprep.subr.mxu0 0.0
    %2322 = vmatpush1.msra.mxu0 0.0
    %2323 = vmatprep.subr.mxu0 0.0
    %2324 = vmatpush1.msra.mxu0 0.0
    %2325 = vmatprep.subr.mxu0 0.0
    %2326 = vmatpush1.msra.mxu0 0.0
    %2327 = vmatprep.subr.mxu0 0.0
    %2328 = vmatpush1.msra.mxu0 0.0
    %2329 = vmatprep.subr.mxu0 0.0
    %2330 = vmatpush1.msra.mxu0 0.0
    %2331 = vmatprep.subr.mxu0 0.0
    %2332 = vmatpush1.msra.mxu0 0.0
    %2333 = vmatprep.subr.mxu0 0.0
    %2334 = vmatpush1.msra.mxu0 0.0
    %2335 = vmatprep.subr.mxu0 0.0
    %2336 = vmatpush1.msra.mxu0 0.0
    %2337 = vmatprep.subr.mxu0 0.0
    %2338 = vmatpush1.msra.mxu0 0.0
    %2339 = vmatprep.subr.mxu0 0.0
    %2340 = vmatpush1.msra.mxu0 0.0
    %2341 = vmatprep.subr.mxu0 0.0
    %2342 = vmatpush1.msra.mxu0 0.0
    %2343 = vmatprep.subr.mxu0 0.0
    %2344 = vmatpush1.msra.mxu0 0.0
    %2345 = vmatprep.subr.mxu0 0.0
    %2346 = vmatpush1.msra.mxu0 %v48
    %2347 = vmatprep.subr.mxu0 0.0
    %2348 = vmatpush1.msra.mxu0 %v47
    %2349 = vmatprep.subr.mxu0 0.0
    %2350 = vmatpush1.msra.mxu0 %v46
    %2351 = vmatprep.subr.mxu0 0.0
    %2352 = vmatpush1.msra.mxu0 %v45
    %2353 = vmatprep.subr.mxu0 0.0
    %2354 = vmatpush2.msra.mxu0 0.0
    %2355 = vmatprep.subr.mxu0 0.0
    %2356 = vmatpush2.msra.mxu0 0.0
    %2357 = vmatprep.subr.mxu0 0.0
    %2358 = vmatpush2.msra.mxu0 0.0
    %2359 = vmatprep.subr.mxu0 0.0
    %2360 = vmatpush2.msra.mxu0 0.0
    %2361 = vmatprep.subr.mxu0 0.0
    %2362 = vmatpush2.msra.mxu0 0.0
    %2363 = vmatprep.subr.mxu0 0.0
    %2364 = vmatpush2.msra.mxu0 0.0
    %2365 = vmatprep.subr.mxu0 0.0
    %2366 = vmatpush2.msra.mxu0 0.0
    %2367 = vmatprep.subr.mxu0 0.0
    %2368 = vmatpush2.msra.mxu0 0.0
    %2369 = vmatprep.subr.mxu0 0.0
    %2370 = vmatpush2.msra.mxu0 0.0
    %2371 = vmatprep.subr.mxu0 0.0
    %2372 = vmatpush2.msra.mxu0 0.0
    %2373 = vmatprep.subr.mxu0 0.0
    %2374 = vmatpush2.msra.mxu0 0.0
    %2375 = vmatprep.subr.mxu0 0.0
    %2376 = vmatpush2.msra.mxu0 0.0
    %2377 = vmatprep.subr.mxu0 0.0
    %2378 = vmatpush2.msra.mxu0 0.0
    %2379 = vmatprep.subr.mxu0 0.0
    %2380 = vmatpush2.msra.mxu0 0.0
    %2381 = vmatprep.subr.mxu0 0.0
    %2382 = vmatpush2.msra.mxu0 0.0
    %2383 = vmatprep.subr.mxu0 0.0
    %2384 = vmatpush2.msra.mxu0 0.0
    %2385 = vmatprep.mubr.f32.mxu0 0.0
    %2386 = vmatmul.mubr.f32.gmra.mxu0 %v2319
    %v2387 = vpop.f32.mrf.mxu0
    %v2388 = vadd.f32 %v2313, %v2387
    %v2389 = vpop.f32.mrf.mxu0
    %2390 = vdwg.mxu0
    %v2391 = vadd.f32 %v2388, %v646
    %v2392 = vtanh.pop %v2391
    %v2393 = vmul.f32 %v2392, 0.5
    %v2394 = vadd.f32 %v2393, 0.5
    %v2395 = vmul.f32 %v2394, %v2234
    %2397 = vrot.lane.b32.xlu0 %v2392, 64
    %v2398 = vpop.permute.xlu0 %2397
    %v2400 = vmul.f32 %v2394, %v2398
    %2402 = vrot.lane.b32.xlu0 %v2400, 32
    %v2403 = vpop.permute.xlu0 %2402
    %v2405 = vadd.f32 %v2395, %v2403
    %v2406 = vtanh.pop %v2405
    %2408 = vrot.lane.b32.xlu0 %v2406, 64
    %v2409 = vpop.permute.xlu0 %2408
    %v2411 = vmul.f32 %v2394, %v2409
    %v2412 = vld [vmem:[%s5] sm:$0x1]
    %v2414 = vlaneseq
    %v2415 = vshrl.u32 %v2414, 7
    %v2416 = vsub.s32 0, %v2415
    %v2417 = vrot.slane %v2412, %v2416
    %2418 = vrot.lane.b32.xlu0 %v2417, 96
    %v2419 = vpop.permute.xlu0 %2418
    %v2421 = vmul.f32 %v2411, %v2419
    %2423 = vrot.lane.b32.xlu0 %v2421, 32
    %v2424 = vpop.permute.xlu0 %2423
    %v2426 = vsel %vm311, %v2424, 0.0
    %2427 = vadd.xlane.f32.xlu0 %v2426
    %v2428 = vpop.xlane.xlu0 %2427
    %vm2429 = vcmask 7168
    %2430 = vst.msk [vmem:[%s6] sm:$0xff] %vm2429, %v2428
    // Predicated region
    $region30: #{tpu_custom_call.1} parent=1 // pred_check
      _
    $region31: #{tpu_custom_call.1} parent=1 // pred_check_branch
      %2432 = sbr.rel (0) target = $region33
    $region32: #{tpu_custom_call.1} parent=1 // pred_region
      _
    $region33: #{tpu_custom_call.1} parent=1 // pred_fallthru
      _
    // Predicated region
    $region34: #{tpu_custom_call.1} parent=1 // pred_check
      _
    $region35: #{tpu_custom_call.1} parent=1 // pred_check_branch
      %2434 = sbr.rel (0) target = $region37
    $region36: #{tpu_custom_call.1} parent=1 // pred_region
      _
    $region37: #{tpu_custom_call.1} parent=1 // pred_fallthru
      _
    %2435 = vsyncpa [#allocation3], 1

</llo_original>
